<compile_context>
chip_gen: v5e
topology: v5e:2x2
jax: 0.10.0
libtpu: 0.0.40
codegen_flags: <defaults>
</compile_context>

<pallas_src>
import functools

import numpy as np
import jax
import jax.numpy as jnp
from jax.experimental import pallas as pl
from jax.experimental.pallas import tpu as pltpu


@functools.lru_cache(None)
def _vmem_limit_bytes():
    # Generation-aware scoped-VMEM limit: ~3/4 of physical per-TC VMEM
    # (64 MiB on v7x, 128 MiB on v5e/v6e), capped at 100 MiB.
    try:
        phys = int(pltpu.get_tpu_info().vmem_capacity_bytes)
    except Exception:
        phys = 64 * 1024 * 1024  # conservative fallback (v7x per-TC VMEM)
    return int(min(phys * 3 // 4, 100 * 1024 * 1024))


def _cparams(dims):
    return pltpu.CompilerParams(dimension_semantics=dims,
                                vmem_limit_bytes=_vmem_limit_bytes())


def _spatial_tile(s, max_tile=2048):
    """Largest multiple-of-128 divisor of s that is <= max_tile (else s)."""
    if s <= max_tile:
        return s
    for t in range(max_tile - max_tile % 128, 127, -128):
        if s % t == 0:
            return t
    # TODO(synk): no 128-multiple divisor <= max_tile; fall back to untiled
    # (correct, but loses pipelining for pathological spatial sizes).
    return s


# ----------------------------------------------------------------------------
# K1: attention maps at theta's grid (both gates stacked), grid (B,)
# ----------------------------------------------------------------------------
def _att_map_kernel(*refs, same_grid):
    if same_grid:
        (xs_ref, g_ref, theta_w_ref, phi_w_ref, phi_b_ref,
         psi_w_ref, psi_b_ref, att_ref) = refs
        mphi_ref = None
    else:
        (xs_ref, g_ref, mphi_ref, theta_w_ref, phi_w_ref, phi_b_ref,
         psi_w_ref, psi_b_ref, att_ref) = refs

    # theta: 2x2/stride-2 conv as one matmul on the space-to-depth input
    # (both gates stacked along the weight's row dimension).
    theta = jnp.dot(theta_w_ref[...], xs_ref[0],
                    preferred_element_type=jnp.float32)               # (2Ci, St)
    # phi: 1x1 conv (with bias) on the gating signal (both gates stacked).
    phi = jnp.dot(phi_w_ref[...], g_ref[0],
                  preferred_element_type=jnp.float32) + phi_b_ref[...]  # (2Ci, Sg)
    if same_grid:
        phi_up = phi   # bilinear resize to the same size is the identity
    else:
        # TODO(synk): dense (Sg, St) coefficient matrix; replace with the
        # separable Uh/Uw form if large mismatched grids ever show up.
        phi_up = jnp.dot(phi, mphi_ref[...],
                         preferred_element_type=jnp.float32)          # (2Ci, St)
    f = jnp.maximum(theta + phi_up, 0.0)
    # psi (Ci -> 1) per gate == one block-diagonal (G, 2Ci) matmul.
    s = jnp.dot(psi_w_ref[...], f,
                preferred_element_type=jnp.float32) + psi_b_ref[...]  # (G, St)
    att_ref[0] = jax.nn.sigmoid(s)


def attention_maps(x_s2d, g_flat, m_phiT, theta_w, phi_w, phi_b, psi_mat, psi_b):
    B, Kp, St = x_s2d.shape
    Cg, Sg = g_flat.shape[1], g_flat.shape[2]
    C2 = theta_w.shape[0]
    G = psi_mat.shape[0]
    same_grid = m_phiT is None

    in_specs = [
        pl.BlockSpec((1, Kp, St), lambda b: (b, 0, 0)),          # x_s2d (bf16)
        pl.BlockSpec((1, Cg, Sg), lambda b: (b, 0, 0)),          # g_flat (bf16)
    ]
    args = [x_s2d, g_flat]
    if not same_grid:
        in_specs.append(pl.BlockSpec((Sg, St), lambda b: (0, 0)))
        args.append(m_phiT)
    in_specs += [
        pl.BlockSpec((C2, Kp), lambda b: (0, 0)),                # theta_w
        pl.BlockSpec((C2, Cg), lambda b: (0, 0)),                # phi_w
        pl.BlockSpec((C2, 1), lambda b: (0, 0)),                 # phi_b
        pl.BlockSpec((G, C2), lambda b: (0, 0)),                 # psi (block diag)
        pl.BlockSpec((G, 1), lambda b: (0, 0)),                  # psi_b
    ]
    args += [theta_w, phi_w, phi_b, psi_mat, psi_b]

    return pl.pallas_call(
        functools.partial(_att_map_kernel, same_grid=same_grid),
        out_shape=jax.ShapeDtypeStruct((B, G, St), jnp.float32),
        grid_spec=pltpu.PrefetchScalarGridSpec(
            num_scalar_prefetch=0,
            grid=(B,),
            in_specs=in_specs,
            out_specs=pl.BlockSpec((1, G, St), lambda b: (b, 0, 0)),
        ),
        compiler_params=_cparams(("parallel",)),
    )(*args)


# ----------------------------------------------------------------------------
# K2: separable bilinear upsample of the attention maps, grid (B,)
# ----------------------------------------------------------------------------
def _upsample_kernel(att_ref, uh_ref, uwT_ref, out_ref, *, n_gates):
    for g in range(n_gates):                       # static unroll (n_gates == 2)
        tmp = jnp.dot(uh_ref[...], att_ref[0, g],
                      preferred_element_type=jnp.float32)              # (H, Wt)
        out_ref[0, g] = jnp.dot(tmp, uwT_ref[...],
                                preferred_element_type=jnp.float32)    # (H, W)


def upsample_attention(att2d, uh, uwT):
    B, G, Ht, Wt = att2d.shape
    H, W = uh.shape[0], uwT.shape[1]
    return pl.pallas_call(
        functools.partial(_upsample_kernel, n_gates=G),
        out_shape=jax.ShapeDtypeStruct((B, G, H, W), jnp.float32),
        grid_spec=pltpu.PrefetchScalarGridSpec(
            num_scalar_prefetch=0,
            grid=(B,),
            in_specs=[
                pl.BlockSpec((1, G, Ht, Wt), lambda b: (b, 0, 0, 0)),
                pl.BlockSpec((H, Ht), lambda b: (0, 0)),
                pl.BlockSpec((Wt, W), lambda b: (0, 0)),
            ],
            out_specs=pl.BlockSpec((1, G, H, W), lambda b: (b, 0, 0, 0)),
        ),
        compiler_params=_cparams(("parallel",)),
    )(att2d, uh, uwT)


# ----------------------------------------------------------------------------
# K3: W 1x1 conv (both gates) + attention gating + gate-BN partial stats
#     grid (B, S/T); z = (W_stack @ x) * expand(att) + b   (gating commutes
#     with the 1x1 conv because att is a per-pixel scalar)
# ----------------------------------------------------------------------------
def _gate_kernel(x_ref, att_ref, w_ref, wb_ref, e_ref, z_ref, sum_ref, sq_ref):
    @pl.when(pl.program_id(1) == 0)
    def _():
        sum_ref[...] = jnp.zeros_like(sum_ref)
        sq_ref[...] = jnp.zeros_like(sq_ref)

    zp = jnp.dot(w_ref[...], x_ref[0],
                 preferred_element_type=jnp.float32)                 # (2Cin, T)
    att = att_ref[0].astype(jnp.float32)                             # (G, T)
    att_e = jnp.dot(e_ref[...], att,
                    preferred_element_type=jnp.float32)              # (2Cin, T)
    z = zp * att_e + wb_ref[...]
    z_ref[0] = z.astype(z_ref.dtype)
    # gate-BN batch statistics: per-batch partials, finished in the wrapper.
    sum_ref[0] += jnp.sum(z, axis=1, keepdims=True)
    sq_ref[0] += jnp.sum(z * z, axis=1, keepdims=True)


def gate_apply(x_flat, att_up, w_stack, wb_stack, e_mat, *, tile):
    B, Cin, S = x_flat.shape
    G = att_up.shape[1]
    C2 = w_stack.shape[0]
    ns = S // tile
    return pl.pallas_call(
        _gate_kernel,
        out_shape=(
            jax.ShapeDtypeStruct((B, C2, S), jnp.bfloat16),   # z (bf16 intermediate)
            jax.ShapeDtypeStruct((B, C2, 1), jnp.float32),    # sum(z) per batch
            jax.ShapeDtypeStruct((B, C2, 1), jnp.float32),    # sum(z^2) per batch
        ),
        grid_spec=pltpu.PrefetchScalarGridSpec(
            num_scalar_prefetch=0,
            grid=(B, ns),
            in_specs=[
                pl.BlockSpec((1, Cin, tile), lambda b, s: (b, 0, s)),   # x (bf16)
                pl.BlockSpec((1, G, tile), lambda b, s: (b, 0, s)),     # att_up
                pl.BlockSpec((C2, Cin), lambda b, s: (0, 0)),           # W stacked
                pl.BlockSpec((C2, 1), lambda b, s: (0, 0)),             # W bias
                pl.BlockSpec((C2, G), lambda b, s: (0, 0)),             # gate expand
            ],
            out_specs=(
                pl.BlockSpec((1, C2, tile), lambda b, s: (b, 0, s)),
                pl.BlockSpec((1, C2, 1), lambda b, s: (b, 0, 0)),
                pl.BlockSpec((1, C2, 1), lambda b, s: (b, 0, 0)),
            ),
        ),
        compiler_params=_cparams(("parallel", "arbitrary")),
    )(x_flat, att_up, w_stack, wb_stack, e_mat)


# ----------------------------------------------------------------------------
# K4: gate-BN apply + combine 1x1 conv (one (Cin, 2Cin) matmul) + combine-BN
#     partial statistics, grid (B, S/T)
# ----------------------------------------------------------------------------
def _combine_kernel(z_ref, gsc_ref, gsh_ref, cw_ref, cb_ref,
                    zc_ref, csum_ref, csq_ref):
    @pl.when(pl.program_id(1) == 0)
    def _():
        csum_ref[...] = jnp.zeros_like(csum_ref)
        csq_ref[...] = jnp.zeros_like(csq_ref)

    zn = z_ref[0].astype(jnp.float32) * gsc_ref[...] + gsh_ref[...]  # (2Cin, T)
    zc = jnp.dot(cw_ref[...], zn.astype(jnp.bfloat16),
                 preferred_element_type=jnp.float32) + cb_ref[...]   # (Cin, T)
    zc_ref[0] = zc
    csum_ref[0] += jnp.sum(zc, axis=1, keepdims=True)
    csq_ref[0] += jnp.sum(zc * zc, axis=1, keepdims=True)


def combine_gates(z, g_scale, g_shift, comb_w, comb_b, *, tile):
    B, C2, S = z.shape
    Cin = comb_w.shape[0]
    ns = S // tile
    return pl.pallas_call(
        _combine_kernel,
        out_shape=(
            jax.ShapeDtypeStruct((B, Cin, S), jnp.float32),
            jax.ShapeDtypeStruct((B, Cin, 1), jnp.float32),
            jax.ShapeDtypeStruct((B, Cin, 1), jnp.float32),
        ),
        grid_spec=pltpu.PrefetchScalarGridSpec(
            num_scalar_prefetch=0,
            grid=(B, ns),
            in_specs=[
                pl.BlockSpec((1, C2, tile), lambda b, s: (b, 0, s)),    # z (bf16)
                pl.BlockSpec((C2, 1), lambda b, s: (0, 0)),             # BN scale
                pl.BlockSpec((C2, 1), lambda b, s: (0, 0)),             # BN shift
                pl.BlockSpec((Cin, C2), lambda b, s: (0, 0)),           # combine W
                pl.BlockSpec((Cin, 1), lambda b, s: (0, 0)),            # combine b
            ],
            out_specs=(
                pl.BlockSpec((1, Cin, tile), lambda b, s: (b, 0, s)),
                pl.BlockSpec((1, Cin, 1), lambda b, s: (b, 0, 0)),
                pl.BlockSpec((1, Cin, 1), lambda b, s: (b, 0, 0)),
            ),
        ),
        compiler_params=_cparams(("parallel", "arbitrary")),
    )(z, g_scale, g_shift, comb_w, comb_b)


# ----------------------------------------------------------------------------
# K5: combine-BN apply + ReLU, grid (B, S/T), fully parallel
# ----------------------------------------------------------------------------
def _bn_relu_kernel(zc_ref, sc_ref, sh_ref, out_ref):
    out_ref[0] = jnp.maximum(zc_ref[0] * sc_ref[...] + sh_ref[...], 0.0)


def bn_relu(zc, scale, shift, *, tile):
    B, Cin, S = zc.shape
    ns = S // tile
    return pl.pallas_call(
        _bn_relu_kernel,
        out_shape=jax.ShapeDtypeStruct((B, Cin, S), jnp.float32),
        grid_spec=pltpu.PrefetchScalarGridSpec(
            num_scalar_prefetch=0,
            grid=(B, ns),
            in_specs=[
                pl.BlockSpec((1, Cin, tile), lambda b, s: (b, 0, s)),
                pl.BlockSpec((Cin, 1), lambda b, s: (0, 0)),
                pl.BlockSpec((Cin, 1), lambda b, s: (0, 0)),
            ],
            out_specs=pl.BlockSpec((1, Cin, tile), lambda b, s: (b, 0, s)),
        ),
        compiler_params=_cparams(("parallel", "parallel")),
    )(zc, scale, shift)


# ----------------------------------------------------------------------------
# Glue: bilinear coefficients, BN folding, block composition, parameters
# ----------------------------------------------------------------------------
def bilinear_matrix(out_size, in_size):
    # torch F.interpolate 'bilinear', align_corners=False (F.upsample default).
    o = np.arange(out_size, dtype=np.float64)
    scale = in_size / out_size
    src = np.maximum((o + 0.5) * scale - 0.5, 0.0)
    i0 = np.minimum(np.floor(src).astype(np.int64), in_size - 1)
    i1 = np.minimum(i0 + 1, in_size - 1)
    lam = src - i0
    M = np.zeros((out_size, in_size), dtype=np.float32)
    M[np.arange(out_size), i0] += (1.0 - lam)
    M[np.arange(out_size), i1] += lam
    return M


def _bn_fold(sum_b, sq_b, gamma, beta, count, eps):
    # Finish per-batch partial sums (tiny per-channel XLA reduction) and fold
    # the training-mode BN into a scale/shift pair.  Variance is clamped >= 0
    # (single-pass E[z^2]-mean^2 can cancel slightly negative in f32).
    total = jnp.sum(sum_b, axis=0)
    total_sq = jnp.sum(sq_b, axis=0)
    mean = total / count
    var = jnp.maximum(total_sq / count - mean * mean, 0.0)
    scale = gamma * jax.lax.rsqrt(var + eps)
    shift = beta - mean * scale
    return scale, shift


def multi_attention_block(x_nchw, g_nchw, params, sub=(2, 2), eps=1e-5):
    B, Cin, H, W = x_nchw.shape
    _, Cg, Hg, Wg = g_nchw.shape
    sh, sw = sub
    Ht, Wt = H // sh, W // sw
    St, S, Sg = Ht * Wt, H * W, Hg * Wg
    G, Ci = params["phi_w"].shape[0], params["phi_w"].shape[1]

    x_bf = x_nchw.astype(jnp.bfloat16)
    g_bf = g_nchw.astype(jnp.bfloat16)

    # Channels-first, flattened-spatial (lane-dense) views: free bitcasts.
    x_flat = x_bf.reshape(B, Cin, S)
    g_flat = g_bf.reshape(B, Cg, Sg)

    # Space-to-depth for the 2x2/stride-2 theta conv (patch order cin,kh,kw).
    # TODO(synk): fold this relayout into K1 (strided index_map / in-kernel
    # strided loads) to drop the remaining |x|-sized HBM round trip.
    x_s2d = (x_bf.reshape(B, Cin, Ht, sh, Wt, sw)
             .transpose(0, 1, 3, 5, 2, 4)
             .reshape(B, Cin * sh * sw, St))

    # Stacked (both gates) weights; matmul operands in bf16, biases/BN in f32.
    theta_w = params["theta_w"].reshape(G * Ci, -1).astype(jnp.bfloat16)
    phi_w = params["phi_w"].reshape(G * Ci, Cg).astype(jnp.bfloat16)
    phi_b = params["phi_b"].reshape(G * Ci, 1)
    psi_v = params["psi_w"][:, :, 0]                                    # (G, Ci)
    psi_mat = (jnp.eye(G, dtype=jnp.float32)[:, :, None]
               * psi_v[None]).reshape(G, G * Ci)                        # block diag
    psi_b = params["psi_b"].reshape(G, 1)
    w_stack = params["w_w"].reshape(G * Cin, Cin).astype(jnp.bfloat16)
    wb_stack = params["w_b"].reshape(G * Cin, 1)
    bn_gamma = params["bn_g"].reshape(G * Cin, 1)
    bn_beta = params["bn_b"].reshape(G * Cin, 1)
    comb_w = (params["comb_w"].transpose(1, 0, 2)
              .reshape(Cin, G * Cin).astype(jnp.bfloat16))
    comb_b = params["comb_b"]
    e_mat = jnp.repeat(jnp.eye(G, dtype=jnp.float32), Cin, axis=0)      # (2Cin, G)

    # Bilinear coefficients (align_corners=False, i.e. F.upsample default).
    # In the decoder the gating grid equals theta's grid, so the phi upsample
    # is the identity and the dense coefficient matrix is never materialized.
    same_grid = (Hg, Wg) == (Ht, Wt)
    m_phiT = None if same_grid else jnp.asarray(
        np.kron(bilinear_matrix(Ht, Hg), bilinear_matrix(Wt, Wg)).T)    # (Sg, St)
    uh = jnp.asarray(bilinear_matrix(H, Ht))                            # (H, Ht)
    uwT = jnp.asarray(bilinear_matrix(W, Wt).T)                         # (Wt, W)

    # K1: attention maps at theta's grid (both gates), lane-dense (B, G, St).
    att = attention_maps(x_s2d, g_flat, m_phiT,
                         theta_w, phi_w, phi_b, psi_mat, psi_b)

    # K2: separable bilinear upsample of the maps to the input resolution.
    att_up = upsample_attention(att.reshape(B, G, Ht, Wt), uh, uwT)     # (B,G,H,W)

    tile = _spatial_tile(S)

    # K3: gating + per-gate W 1x1 conv + gate-BN partial statistics.
    z, gsum, gsq = gate_apply(x_flat, att_up.reshape(B, G, S),
                              w_stack, wb_stack, e_mat, tile=tile)
    g_scale, g_shift = _bn_fold(gsum, gsq, bn_gamma, bn_beta, B * S, eps)

    # K4: gate-BN apply + combine 1x1 conv + combine-BN partial statistics.
    zc, csum, csq = combine_gates(z, g_scale, g_shift, comb_w, comb_b, tile=tile)
    c_scale, c_shift = _bn_fold(csum, csq, params["comb_bn_g"],
                                params["comb_bn_b"], B * S, eps)

    # K5: combine-BN apply + ReLU.
    out = bn_relu(zc, c_scale, c_shift, tile=tile)

    return out.reshape(B, Cin, H, W), att_up


def init_params(key, in_ch, gate_ch, inter_ch, sub=(2, 2), n_gates=2):
    ks = sub[0] * sub[1]
    G = n_gates

    def kaiming(k, shape, fan_in):
        return (jnp.sqrt(2.0 / fan_in) * jax.random.normal(k, shape)).astype(jnp.float32)

    kk = jax.random.split(key, 12)
    return dict(
        # stacked over the gate axis (gate_block_1 / gate_block_2)
        theta_w=kaiming(kk[0], (G, inter_ch, ks * in_ch), ks * in_ch),
        phi_w=kaiming(kk[1], (G, inter_ch, gate_ch), gate_ch),
        phi_b=(0.01 * jax.random.normal(kk[2], (G, inter_ch, 1))).astype(jnp.float32),
        psi_w=kaiming(kk[3], (G, inter_ch, 1), inter_ch),
        psi_b=(0.01 * jax.random.normal(kk[4], (G,))).astype(jnp.float32),
        w_w=kaiming(kk[5], (G, in_ch, in_ch), in_ch),
        w_b=(0.01 * jax.random.normal(kk[6], (G, in_ch, 1))).astype(jnp.float32),
        bn_g=(1.0 + 0.02 * jax.random.normal(kk[7], (G, in_ch, 1))).astype(jnp.float32),
        bn_b=jnp.zeros((G, in_ch, 1), jnp.float32),
        # combine conv split per gate: comb_w[g] == torch weight[:, g*Cin:(g+1)*Cin]
        comb_w=kaiming(kk[8], (G, in_ch, in_ch), 2 * in_ch),
        comb_b=(0.01 * jax.random.normal(kk[9], (in_ch, 1))).astype(jnp.float32),
        comb_bn_g=(1.0 + 0.02 * jax.random.normal(kk[10], (in_ch, 1))).astype(jnp.float32),
        comb_bn_b=jnp.zeros((in_ch, 1), jnp.float32),
    )


if __name__ == "__main__":
    # TODO(synk): Decoder_Attention's UpBlock / out_conv are not defined in the
    # provided spec; this script implements its MultiAttentionBlock forward.
    B, Cin, H, W = 2, 4, 16, 16          # input feature map (NCHW)
    Cg = 6                               # gating channels
    inter = 4                            # inter_size

    key = jax.random.PRNGKey(0)
    kx, kg1, kg2, kp = jax.random.split(key, 4)
    x = jax.random.normal(kx, (B, Cin, H, W), jnp.float32)
    # decoder-typical case: gating grid == theta grid (identity phi upsample)
    g_same = jax.random.normal(kg1, (B, Cg, H // 2, W // 2), jnp.float32)
    # general case: coarser gating grid (dense phi-upsample fallback path)
    g_coarse = jax.random.normal(kg2, (B, Cg, 4, 4), jnp.float32)
    params = init_params(kp, Cin, Cg, inter)

    fn = jax.jit(lambda a, b: multi_attention_block(a, b, params))

    ok = True
    for g in (g_same, g_coarse):
        out, att = fn(x, g)
        jax.block_until_ready((out, att))
        ok &= out.shape == (B, Cin, H, W)
        ok &= att.shape == (B, 2, H, W)
        ok &= bool(jnp.all(jnp.isfinite(out))) and bool(jnp.all(jnp.isfinite(att)))

    assert ok
    print("KERNEL_OK")
</pallas_src>

<mosaic_0001>
module attributes {stable_mosaic.version = 11 : i64} {
  func.func @_att_map_kernel(%arg0: i32, %arg1: memref<1x16x64xbf16, #tpu.memory_space<vmem>>, %arg2: memref<1x6x64xbf16, #tpu.memory_space<vmem>>, %arg3: memref<8x16xbf16, #tpu.memory_space<vmem>>, %arg4: memref<8x6xbf16, #tpu.memory_space<vmem>>, %arg5: memref<8x1xf32, #tpu.memory_space<vmem>>, %arg6: memref<2x8xf32, #tpu.memory_space<vmem>>, %arg7: memref<2x1xf32, #tpu.memory_space<vmem>>, %arg8: memref<1x2x64xf32, #tpu.memory_space<vmem>>) attributes {dimension_semantics = [#tpu.dimension_semantics<parallel>], iteration_bounds = array<i64: 2>, scalar_prefetch = 0 : i64, scratch_operands = 0 : i64, tpu.core_type = #tpu.core_type<tc>, window_params = [{transform_indices = @transform_0, window_bounds = array<i64: 1, 16, 64>}, {transform_indices = @transform_1, window_bounds = array<i64: 1, 6, 64>}, {pipeline_mode = #tpu.pipeline_mode<synchronous>, transform_indices = @transform_2, window_bounds = array<i64: 8, 16>}, {pipeline_mode = #tpu.pipeline_mode<synchronous>, transform_indices = @transform_3, window_bounds = array<i64: 8, 6>}, {pipeline_mode = #tpu.pipeline_mode<synchronous>, transform_indices = @transform_4, window_bounds = array<i64: 8, 1>}, {pipeline_mode = #tpu.pipeline_mode<synchronous>, transform_indices = @transform_5, window_bounds = array<i64: 2, 8>}, {pipeline_mode = #tpu.pipeline_mode<synchronous>, transform_indices = @transform_6, window_bounds = array<i64: 2, 1>}, {transform_indices = @transform_7, window_bounds = array<i64: 1, 2, 64>}]} {
    %c0 = arith.constant 0 : index
    %c0_0 = arith.constant 0 : index
    %0 = vector.load %arg3[%c0, %c0_0] : memref<8x16xbf16, #tpu.memory_space<vmem>>, vector<8x16xbf16>
    %c0_1 = arith.constant 0 : index
    %c0_2 = arith.constant 0 : index
    %c0_3 = arith.constant 0 : index
    %1 = vector.load %arg1[%c0_1, %c0_2, %c0_3] : memref<1x16x64xbf16, #tpu.memory_space<vmem>>, vector<1x16x64xbf16>
    %2 = vector.shape_cast %1 : vector<1x16x64xbf16> to vector<16x64xbf16>
    %cst = arith.constant dense<0.000000e+00> : vector<8x64xf32>
    %3 = tpu.matmul %0, %2, %cst {dimension_numbers = #tpu.dot_dimension_numbers<[1], [0], [0], [1], [0, 0, 1, 1], [], []>} : vector<8x16xbf16>, vector<16x64xbf16>, vector<8x64xf32> -> vector<8x64xf32>
    %c0_4 = arith.constant 0 : index
    %c0_5 = arith.constant 0 : index
    %4 = vector.load %arg4[%c0_4, %c0_5] : memref<8x6xbf16, #tpu.memory_space<vmem>>, vector<8x6xbf16>
    %c0_6 = arith.constant 0 : index
    %c0_7 = arith.constant 0 : index
    %c0_8 = arith.constant 0 : index
    %5 = vector.load %arg2[%c0_6, %c0_7, %c0_8] : memref<1x6x64xbf16, #tpu.memory_space<vmem>>, vector<1x6x64xbf16>
    %6 = vector.shape_cast %5 : vector<1x6x64xbf16> to vector<6x64xbf16>
    %cst_9 = arith.constant dense<0.000000e+00> : vector<8x64xf32>
    %7 = tpu.matmul %4, %6, %cst_9 {dimension_numbers = #tpu.dot_dimension_numbers<[1], [0], [0], [1], [0, 0, 1, 1], [], []>} : vector<8x6xbf16>, vector<6x64xbf16>, vector<8x64xf32> -> vector<8x64xf32>
    %c0_10 = arith.constant 0 : index
    %c0_11 = arith.constant 0 : index
    %8 = vector.load %arg5[%c0_10, %c0_11] : memref<8x1xf32, #tpu.memory_space<vmem>>, vector<8x1xf32>
    %9 = vector.broadcast %8 : vector<8x1xf32> to vector<8x64xf32>
    %10 = arith.addf %7, %9 : vector<8x64xf32>
    %11 = arith.addf %3, %10 : vector<8x64xf32>
    %cst_12 = arith.constant 0.000000e+00 : f32
    %12 = vector.broadcast %cst_12 : f32 to vector<8x64xf32>
    %13 = arith.maximumf %11, %12 : vector<8x64xf32>
    %c0_13 = arith.constant 0 : index
    %c0_14 = arith.constant 0 : index
    %14 = vector.load %arg6[%c0_13, %c0_14] : memref<2x8xf32, #tpu.memory_space<vmem>>, vector<2x8xf32>
    %cst_15 = arith.constant dense<0.000000e+00> : vector<2x64xf32>
    %15 = tpu.matmul %14, %13, %cst_15 {dimension_numbers = #tpu.dot_dimension_numbers<[1], [0], [0], [1], [0, 0, 1, 1], [], []>} : vector<2x8xf32>, vector<8x64xf32>, vector<2x64xf32> -> vector<2x64xf32>
    %c0_16 = arith.constant 0 : index
    %c0_17 = arith.constant 0 : index
    %16 = vector.load %arg7[%c0_16, %c0_17] : memref<2x1xf32, #tpu.memory_space<vmem>>, vector<2x1xf32>
    %17 = vector.broadcast %16 : vector<2x1xf32> to vector<2x64xf32>
    %18 = arith.addf %15, %17 : vector<2x64xf32>
    %19 = arith.negf %18 : vector<2x64xf32>
    %20 = math.exp %19 : vector<2x64xf32>
    %cst_18 = arith.constant 1.000000e+00 : f32
    %21 = vector.broadcast %cst_18 : f32 to vector<2x64xf32>
    %22 = arith.addf %21, %20 : vector<2x64xf32>
    %23 = arith.divf %21, %22 : vector<2x64xf32>
    %c0_19 = arith.constant 0 : index
    %c0_20 = arith.constant 0 : index
    %c0_21 = arith.constant 0 : index
    %24 = vector.load %arg8[%c0_19, %c0_20, %c0_21] : memref<1x2x64xf32, #tpu.memory_space<vmem>>, vector<1x2x64xf32>
    %25 = vector.shape_cast %24 : vector<1x2x64xf32> to vector<2x64xf32>
    %26 = vector.shape_cast %23 : vector<2x64xf32> to vector<1x2x64xf32>
    tpu.vector_store %arg8[%c0_19, %c0_20, %c0_21], %26 {strides = array<i32>} : memref<1x2x64xf32, #tpu.memory_space<vmem>>, vector<1x2x64xf32>,
    return
  }
  func.func @transform_0(%arg0: i32) -> (i32, i32, i32) {
    %c0_i32 = arith.constant 0 : i32
    %c0_i32_0 = arith.constant 0 : i32
    %c0_i32_1 = arith.constant 0 : i32
    return %arg0, %c0_i32, %c0_i32_0 : i32, i32, i32
  }
  func.func @transform_1(%arg0: i32) -> (i32, i32, i32) {
    %c0_i32 = arith.constant 0 : i32
    %c0_i32_0 = arith.constant 0 : i32
    %c0_i32_1 = arith.constant 0 : i32
    return %arg0, %c0_i32, %c0_i32_0 : i32, i32, i32
  }
  func.func @transform_2(%arg0: i32) -> (i32, i32) {
    %c0_i32 = arith.constant 0 : i32
    %c0_i32_0 = arith.constant 0 : i32
    %c0_i32_1 = arith.constant 0 : i32
    return %c0_i32, %c0_i32_0 : i32, i32
  }
  func.func @transform_3(%arg0: i32) -> (i32, i32) {
    %c0_i32 = arith.constant 0 : i32
    %c0_i32_0 = arith.constant 0 : i32
    %c0_i32_1 = arith.constant 0 : i32
    return %c0_i32, %c0_i32_0 : i32, i32
  }
  func.func @transform_4(%arg0: i32) -> (i32, i32) {
    %c0_i32 = arith.constant 0 : i32
    %c0_i32_0 = arith.constant 0 : i32
    %c0_i32_1 = arith.constant 0 : i32
    return %c0_i32, %c0_i32_0 : i32, i32
  }
  func.func @transform_5(%arg0: i32) -> (i32, i32) {
    %c0_i32 = arith.constant 0 : i32
    %c0_i32_0 = arith.constant 0 : i32
    %c0_i32_1 = arith.constant 0 : i32
    return %c0_i32, %c0_i32_0 : i32, i32
  }
  func.func @transform_6(%arg0: i32) -> (i32, i32) {
    %c0_i32 = arith.constant 0 : i32
    %c0_i32_0 = arith.constant 0 : i32
    %c0_i32_1 = arith.constant 0 : i32
    return %c0_i32, %c0_i32_0 : i32, i32
  }
  func.func @transform_7(%arg0: i32) -> (i32, i32, i32) {
    %c0_i32 = arith.constant 0 : i32
    %c0_i32_0 = arith.constant 0 : i32
    %c0_i32_1 = arith.constant 0 : i32
    return %arg0, %c0_i32, %c0_i32_0 : i32, i32, i32
  }
}

module attributes {stable_mosaic.version = 11 : i64} {
  func.func @_upsample_kernel(%arg0: i32, %arg1: memref<1x2x8x8xf32, #tpu.memory_space<vmem>>, %arg2: memref<16x8xf32, #tpu.memory_space<vmem>>, %arg3: memref<8x16xf32, #tpu.memory_space<vmem>>, %arg4: memref<1x2x16x16xf32, #tpu.memory_space<vmem>>) attributes {dimension_semantics = [#tpu.dimension_semantics<parallel>], iteration_bounds = array<i64: 2>, scalar_prefetch = 0 : i64, scratch_operands = 0 : i64, tpu.core_type = #tpu.core_type<tc>, window_params = [{transform_indices = @transform_0, window_bounds = array<i64: 1, 2, 8, 8>}, {pipeline_mode = #tpu.pipeline_mode<synchronous>, transform_indices = @transform_1, window_bounds = array<i64: 16, 8>}, {pipeline_mode = #tpu.pipeline_mode<synchronous>, transform_indices = @transform_2, window_bounds = array<i64: 8, 16>}, {transform_indices = @transform_3, window_bounds = array<i64: 1, 2, 16, 16>}]} {
    %c0 = arith.constant 0 : index
    %c0_0 = arith.constant 0 : index
    %0 = vector.load %arg2[%c0, %c0_0] : memref<16x8xf32, #tpu.memory_space<vmem>>, vector<16x8xf32>
    %c0_1 = arith.constant 0 : index
    %c0_2 = arith.constant 0 : index
    %c0_3 = arith.constant 0 : index
    %c0_4 = arith.constant 0 : index
    %1 = vector.load %arg1[%c0_1, %c0_2, %c0_3, %c0_4] : memref<1x2x8x8xf32, #tpu.memory_space<vmem>>, vector<1x1x8x8xf32>
    %2 = vector.shape_cast %1 : vector<1x1x8x8xf32> to vector<8x8xf32>
    %cst = arith.constant dense<0.000000e+00> : vector<16x8xf32>
    %3 = tpu.matmul %0, %2, %cst {dimension_numbers = #tpu.dot_dimension_numbers<[1], [0], [0], [1], [0, 0, 1, 1], [], []>} : vector<16x8xf32>, vector<8x8xf32>, vector<16x8xf32> -> vector<16x8xf32>
    %c0_5 = arith.constant 0 : index
    %c0_6 = arith.constant 0 : index
    %4 = vector.load %arg3[%c0_5, %c0_6] : memref<8x16xf32, #tpu.memory_space<vmem>>, vector<8x16xf32>
    %cst_7 = arith.constant dense<0.000000e+00> : vector<16x16xf32>
    %5 = tpu.matmul %3, %4, %cst_7 {dimension_numbers = #tpu.dot_dimension_numbers<[1], [0], [0], [1], [0, 0, 1, 1], [], []>} : vector<16x8xf32>, vector<8x16xf32>, vector<16x16xf32> -> vector<16x16xf32>
    %c0_8 = arith.constant 0 : index
    %c0_9 = arith.constant 0 : index
    %c0_10 = arith.constant 0 : index
    %c0_11 = arith.constant 0 : index
    %6 = vector.load %arg4[%c0_8, %c0_9, %c0_10, %c0_11] : memref<1x2x16x16xf32, #tpu.memory_space<vmem>>, vector<1x1x16x16xf32>
    %7 = vector.shape_cast %6 : vector<1x1x16x16xf32> to vector<16x16xf32>
    %8 = vector.shape_cast %5 : vector<16x16xf32> to vector<1x1x16x16xf32>
    tpu.vector_store %arg4[%c0_8, %c0_9, %c0_10, %c0_11], %8 {strides = array<i32>} : memref<1x2x16x16xf32, #tpu.memory_space<vmem>>, vector<1x1x16x16xf32>,
    %c0_12 = arith.constant 0 : index
    %c0_13 = arith.constant 0 : index
    %9 = vector.load %arg2[%c0_12, %c0_13] : memref<16x8xf32, #tpu.memory_space<vmem>>, vector<16x8xf32>
    %c0_14 = arith.constant 0 : index
    %c1 = arith.constant 1 : index
    %c0_15 = arith.constant 0 : index
    %c0_16 = arith.constant 0 : index
    %10 = vector.load %arg1[%c0_14, %c1, %c0_15, %c0_16] : memref<1x2x8x8xf32, #tpu.memory_space<vmem>>, vector<1x1x8x8xf32>
    %11 = vector.shape_cast %10 : vector<1x1x8x8xf32> to vector<8x8xf32>
    %cst_17 = arith.constant dense<0.000000e+00> : vector<16x8xf32>
    %12 = tpu.matmul %9, %11, %cst_17 {dimension_numbers = #tpu.dot_dimension_numbers<[1], [0], [0], [1], [0, 0, 1, 1], [], []>} : vector<16x8xf32>, vector<8x8xf32>, vector<16x8xf32> -> vector<16x8xf32>
    %c0_18 = arith.constant 0 : index
    %c0_19 = arith.constant 0 : index
    %13 = vector.load %arg3[%c0_18, %c0_19] : memref<8x16xf32, #tpu.memory_space<vmem>>, vector<8x16xf32>
    %cst_20 = arith.constant dense<0.000000e+00> : vector<16x16xf32>
    %14 = tpu.matmul %12, %13, %cst_20 {dimension_numbers = #tpu.dot_dimension_numbers<[1], [0], [0], [1], [0, 0, 1, 1], [], []>} : vector<16x8xf32>, vector<8x16xf32>, vector<16x16xf32> -> vector<16x16xf32>
    %c0_21 = arith.constant 0 : index
    %c1_22 = arith.constant 1 : index
    %c0_23 = arith.constant 0 : index
    %c0_24 = arith.constant 0 : index
    %15 = vector.load %arg4[%c0_21, %c1_22, %c0_23, %c0_24] : memref<1x2x16x16xf32, #tpu.memory_space<vmem>>, vector<1x1x16x16xf32>
    %16 = vector.shape_cast %15 : vector<1x1x16x16xf32> to vector<16x16xf32>
    %17 = vector.shape_cast %14 : vector<16x16xf32> to vector<1x1x16x16xf32>
    tpu.vector_store %arg4[%c0_21, %c1_22, %c0_23, %c0_24], %17 {strides = array<i32>} : memref<1x2x16x16xf32, #tpu.memory_space<vmem>>, vector<1x1x16x16xf32>,
    return
  }
  func.func @transform_0(%arg0: i32) -> (i32, i32, i32, i32) {
    %c0_i32 = arith.constant 0 : i32
    %c0_i32_0 = arith.constant 0 : i32
    %c0_i32_1 = arith.constant 0 : i32
    %c0_i32_2 = arith.constant 0 : i32
    return %arg0, %c0_i32, %c0_i32_0, %c0_i32_1 : i32, i32, i32, i32
  }
  func.func @transform_1(%arg0: i32) -> (i32, i32) {
    %c0_i32 = arith.constant 0 : i32
    %c0_i32_0 = arith.constant 0 : i32
    %c0_i32_1 = arith.constant 0 : i32
    return %c0_i32, %c0_i32_0 : i32, i32
  }
  func.func @transform_2(%arg0: i32) -> (i32, i32) {
    %c0_i32 = arith.constant 0 : i32
    %c0_i32_0 = arith.constant 0 : i32
    %c0_i32_1 = arith.constant 0 : i32
    return %c0_i32, %c0_i32_0 : i32, i32
  }
  func.func @transform_3(%arg0: i32) -> (i32, i32, i32, i32) {
    %c0_i32 = arith.constant 0 : i32
    %c0_i32_0 = arith.constant 0 : i32
    %c0_i32_1 = arith.constant 0 : i32
    %c0_i32_2 = arith.constant 0 : i32
    return %arg0, %c0_i32, %c0_i32_0, %c0_i32_1 : i32, i32, i32, i32
  }
}

module attributes {stable_mosaic.version = 11 : i64} {
  func.func @_gate_kernel(%arg0: i32, %arg1: i32, %arg2: memref<1x4x256xbf16, #tpu.memory_space<vmem>>, %arg3: memref<1x2x256xf32, #tpu.memory_space<vmem>>, %arg4: memref<8x4xbf16, #tpu.memory_space<vmem>>, %arg5: memref<8x1xf32, #tpu.memory_space<vmem>>, %arg6: memref<8x2xf32, #tpu.memory_space<vmem>>, %arg7: memref<1x8x256xbf16, #tpu.memory_space<vmem>>, %arg8: memref<1x8x1xf32, #tpu.memory_space<vmem>>, %arg9: memref<1x8x1xf32, #tpu.memory_space<vmem>>) attributes {dimension_semantics = [#tpu.dimension_semantics<parallel>, #tpu.dimension_semantics<arbitrary>], iteration_bounds = array<i64: 2, 1>, scalar_prefetch = 0 : i64, scratch_operands = 0 : i64, tpu.core_type = #tpu.core_type<tc>, window_params = [{transform_indices = @transform_0, window_bounds = array<i64: 1, 4, 256>}, {transform_indices = @transform_1, window_bounds = array<i64: 1, 2, 256>}, {pipeline_mode = #tpu.pipeline_mode<synchronous>, transform_indices = @transform_2, window_bounds = array<i64: 8, 4>}, {pipeline_mode = #tpu.pipeline_mode<synchronous>, transform_indices = @transform_3, window_bounds = array<i64: 8, 1>}, {pipeline_mode = #tpu.pipeline_mode<synchronous>, transform_indices = @transform_4, window_bounds = array<i64: 8, 2>}, {transform_indices = @transform_5, window_bounds = array<i64: 1, 8, 256>}, {transform_indices = @transform_6, window_bounds = array<i64: 1, 8, 1>}, {transform_indices = @transform_7, window_bounds = array<i64: 1, 8, 1>}]} {
    %c0_i32 = arith.constant 0 : i32
    %0 = arith.cmpi eq, %arg1, %c0_i32 : i32
    %1 = arith.extui %0 : i1 to i32
    %c0_i32_0 = arith.constant 0 : i32
    %2 = arith.cmpi ne, %1, %c0_i32_0 : i32
    scf.if %2 {
      %cst_30 = arith.constant 0.000000e+00 : f32
      %36 = vector.broadcast %cst_30 : f32 to vector<1x8x1xf32>
      %c0_31 = arith.constant 0 : index
      %c0_32 = arith.constant 0 : index
      %c0_33 = arith.constant 0 : index
      %37 = vector.load %arg8[%c0_31, %c0_32, %c0_33] : memref<1x8x1xf32, #tpu.memory_space<vmem>>, vector<1x8x1xf32>
      tpu.vector_store %arg8[%c0_31, %c0_32, %c0_33], %36 {strides = array<i32>} : memref<1x8x1xf32, #tpu.memory_space<vmem>>, vector<1x8x1xf32>,
      %cst_34 = arith.constant 0.000000e+00 : f32
      %38 = vector.broadcast %cst_34 : f32 to vector<1x8x1xf32>
      %c0_35 = arith.constant 0 : index
      %c0_36 = arith.constant 0 : index
      %c0_37 = arith.constant 0 : index
      %39 = vector.load %arg9[%c0_35, %c0_36, %c0_37] : memref<1x8x1xf32, #tpu.memory_space<vmem>>, vector<1x8x1xf32>
      tpu.vector_store %arg9[%c0_35, %c0_36, %c0_37], %38 {strides = array<i32>} : memref<1x8x1xf32, #tpu.memory_space<vmem>>, vector<1x8x1xf32>,
    } else {
    }
    %c0 = arith.constant 0 : index
    %c0_1 = arith.constant 0 : index
    %3 = vector.load %arg4[%c0, %c0_1] : memref<8x4xbf16, #tpu.memory_space<vmem>>, vector<8x4xbf16>
    %c0_2 = arith.constant 0 : index
    %c0_3 = arith.constant 0 : index
    %c0_4 = arith.constant 0 : index
    %4 = vector.load %arg2[%c0_2, %c0_3, %c0_4] : memref<1x4x256xbf16, #tpu.memory_space<vmem>>, vector<1x4x256xbf16>
    %5 = vector.shape_cast %4 : vector<1x4x256xbf16> to vector<4x256xbf16>
    %cst = arith.constant dense<0.000000e+00> : vector<8x256xf32>
    %6 = tpu.matmul %3, %5, %cst {dimension_numbers = #tpu.dot_dimension_numbers<[1], [0], [0], [1], [0, 0, 1, 1], [], []>} : vector<8x4xbf16>, vector<4x256xbf16>, vector<8x256xf32> -> vector<8x256xf32>
    %c0_5 = arith.constant 0 : index
    %c0_6 = arith.constant 0 : index
    %c0_7 = arith.constant 0 : index
    %7 = vector.load %arg3[%c0_5, %c0_6, %c0_7] : memref<1x2x256xf32, #tpu.memory_space<vmem>>, vector<1x2x256xf32>
    %8 = vector.shape_cast %7 : vector<1x2x256xf32> to vector<2x256xf32>
    %c0_8 = arith.constant 0 : index
    %c0_9 = arith.constant 0 : index
    %9 = vector.load %arg6[%c0_8, %c0_9] : memref<8x2xf32, #tpu.memory_space<vmem>>, vector<8x2xf32>
    %cst_10 = arith.constant dense<0.000000e+00> : vector<8x256xf32>
    %10 = tpu.matmul %9, %8, %cst_10 {dimension_numbers = #tpu.dot_dimension_numbers<[1], [0], [0], [1], [0, 0, 1, 1], [], []>} : vector<8x2xf32>, vector<2x256xf32>, vector<8x256xf32> -> vector<8x256xf32>
    %11 = arith.mulf %6, %10 : vector<8x256xf32>
    %c0_11 = arith.constant 0 : index
    %c0_12 = arith.constant 0 : index
    %12 = vector.load %arg5[%c0_11, %c0_12] : memref<8x1xf32, #tpu.memory_space<vmem>>, vector<8x1xf32>
    %13 = vector.broadcast %12 : vector<8x1xf32> to vector<8x256xf32>
    %14 = arith.addf %11, %13 : vector<8x256xf32>
    %15 = arith.truncf %14 : vector<8x256xf32> to vector<8x256xbf16>
    %c0_13 = arith.constant 0 : index
    %c0_14 = arith.constant 0 : index
    %c0_15 = arith.constant 0 : index
    %16 = vector.load %arg7[%c0_13, %c0_14, %c0_15] : memref<1x8x256xbf16, #tpu.memory_space<vmem>>, vector<1x8x256xbf16>
    %17 = vector.shape_cast %16 : vector<1x8x256xbf16> to vector<8x256xbf16>
    %18 = vector.shape_cast %15 : vector<8x256xbf16> to vector<1x8x256xbf16>
    tpu.vector_store %arg7[%c0_13, %c0_14, %c0_15], %18 {strides = array<i32>} : memref<1x8x256xbf16, #tpu.memory_space<vmem>>, vector<1x8x256xbf16>,
    %c0_16 = arith.constant 0 : index
    %c0_17 = arith.constant 0 : index
    %c0_18 = arith.constant 0 : index
    %19 = vector.load %arg8[%c0_16, %c0_17, %c0_18] : memref<1x8x1xf32, #tpu.memory_space<vmem>>, vector<1x8x1xf32>
    %20 = vector.shape_cast %19 : vector<1x8x1xf32> to vector<8x1xf32>
    %cst_19 = arith.constant dense<0.000000e+00> : vector<8xf32>
    %21 = vector.multi_reduction <add>, %14, %cst_19 [1] : vector<8x256xf32> to vector<8xf32>
    %22 = vector.shape_cast %21 : vector<8xf32> to vector<8x1xf32>
    %23 = arith.addf %20, %22 : vector<8x1xf32>
    %c0_20 = arith.constant 0 : index
    %c0_21 = arith.constant 0 : index
    %c0_22 = arith.constant 0 : index
    %24 = vector.load %arg8[%c0_20, %c0_21, %c0_22] : memref<1x8x1xf32, #tpu.memory_space<vmem>>, vector<1x8x1xf32>
    %25 = vector.shape_cast %24 : vector<1x8x1xf32> to vector<8x1xf32>
    %26 = vector.shape_cast %23 : vector<8x1xf32> to vector<1x8x1xf32>
    tpu.vector_store %arg8[%c0_20, %c0_21, %c0_22], %26 {strides = array<i32>} : memref<1x8x1xf32, #tpu.memory_space<vmem>>, vector<1x8x1xf32>,
    %c0_23 = arith.constant 0 : index
    %c0_24 = arith.constant 0 : index
    %c0_25 = arith.constant 0 : index
    %27 = vector.load %arg9[%c0_23, %c0_24, %c0_25] : memref<1x8x1xf32, #tpu.memory_space<vmem>>, vector<1x8x1xf32>
    %28 = vector.shape_cast %27 : vector<1x8x1xf32> to vector<8x1xf32>
    %29 = arith.mulf %14, %14 : vector<8x256xf32>
    %cst_26 = arith.constant dense<0.000000e+00> : vector<8xf32>
    %30 = vector.multi_reduction <add>, %29, %cst_26 [1] : vector<8x256xf32> to vector<8xf32>
    %31 = vector.shape_cast %30 : vector<8xf32> to vector<8x1xf32>
    %32 = arith.addf %28, %31 : vector<8x1xf32>
    %c0_27 = arith.constant 0 : index
    %c0_28 = arith.constant 0 : index
    %c0_29 = arith.constant 0 : index
    %33 = vector.load %arg9[%c0_27, %c0_28, %c0_29] : memref<1x8x1xf32, #tpu.memory_space<vmem>>, vector<1x8x1xf32>
    %34 = vector.shape_cast %33 : vector<1x8x1xf32> to vector<8x1xf32>
    %35 = vector.shape_cast %32 : vector<8x1xf32> to vector<1x8x1xf32>
    tpu.vector_store %arg9[%c0_27, %c0_28, %c0_29], %35 {strides = array<i32>} : memref<1x8x1xf32, #tpu.memory_space<vmem>>, vector<1x8x1xf32>,
    return
  }
  func.func @transform_0(%arg0: i32, %arg1: i32) -> (i32, i32, i32) {
    %c0_i32 = arith.constant 0 : i32
    %c0_i32_0 = arith.constant 0 : i32
    return %arg0, %c0_i32, %arg1 : i32, i32, i32
  }
  func.func @transform_1(%arg0: i32, %arg1: i32) -> (i32, i32, i32) {
    %c0_i32 = arith.constant 0 : i32
    %c0_i32_0 = arith.constant 0 : i32
    return %arg0, %c0_i32, %arg1 : i32, i32, i32
  }
  func.func @transform_2(%arg0: i32, %arg1: i32) -> (i32, i32) {
    %c0_i32 = arith.constant 0 : i32
    %c0_i32_0 = arith.constant 0 : i32
    %c0_i32_1 = arith.constant 0 : i32
    return %c0_i32, %c0_i32_0 : i32, i32
  }
  func.func @transform_3(%arg0: i32, %arg1: i32) -> (i32, i32) {
    %c0_i32 = arith.constant 0 : i32
    %c0_i32_0 = arith.constant 0 : i32
    %c0_i32_1 = arith.constant 0 : i32
    return %c0_i32, %c0_i32_0 : i32, i32
  }
  func.func @transform_4(%arg0: i32, %arg1: i32) -> (i32, i32) {
    %c0_i32 = arith.constant 0 : i32
    %c0_i32_0 = arith.constant 0 : i32
    %c0_i32_1 = arith.constant 0 : i32
    return %c0_i32, %c0_i32_0 : i32, i32
  }
  func.func @transform_5(%arg0: i32, %arg1: i32) -> (i32, i32, i32) {
    %c0_i32 = arith.constant 0 : i32
    %c0_i32_0 = arith.constant 0 : i32
    return %arg0, %c0_i32, %arg1 : i32, i32, i32
  }
  func.func @transform_6(%arg0: i32, %arg1: i32) -> (i32, i32, i32) {
    %c0_i32 = arith.constant 0 : i32
    %c0_i32_0 = arith.constant 0 : i32
    %c0_i32_1 = arith.constant 0 : i32
    return %arg0, %c0_i32, %c0_i32_0 : i32, i32, i32
  }
  func.func @transform_7(%arg0: i32, %arg1: i32) -> (i32, i32, i32) {
    %c0_i32 = arith.constant 0 : i32
    %c0_i32_0 = arith.constant 0 : i32
    %c0_i32_1 = arith.constant 0 : i32
    return %arg0, %c0_i32, %c0_i32_0 : i32, i32, i32
  }
}

module attributes {stable_mosaic.version = 11 : i64} {
  func.func @_combine_kernel(%arg0: i32, %arg1: i32, %arg2: memref<1x8x256xbf16, #tpu.memory_space<vmem>>, %arg3: memref<8x1xf32, #tpu.memory_space<vmem>>, %arg4: memref<8x1xf32, #tpu.memory_space<vmem>>, %arg5: memref<4x8xbf16, #tpu.memory_space<vmem>>, %arg6: memref<4x1xf32, #tpu.memory_space<vmem>>, %arg7: memref<1x4x256xf32, #tpu.memory_space<vmem>>, %arg8: memref<1x4x1xf32, #tpu.memory_space<vmem>>, %arg9: memref<1x4x1xf32, #tpu.memory_space<vmem>>) attributes {dimension_semantics = [#tpu.dimension_semantics<parallel>, #tpu.dimension_semantics<arbitrary>], iteration_bounds = array<i64: 2, 1>, scalar_prefetch = 0 : i64, scratch_operands = 0 : i64, tpu.core_type = #tpu.core_type<tc>, window_params = [{transform_indices = @transform_0, window_bounds = array<i64: 1, 8, 256>}, {pipeline_mode = #tpu.pipeline_mode<synchronous>, transform_indices = @transform_1, window_bounds = array<i64: 8, 1>}, {pipeline_mode = #tpu.pipeline_mode<synchronous>, transform_indices = @transform_2, window_bounds = array<i64: 8, 1>}, {pipeline_mode = #tpu.pipeline_mode<synchronous>, transform_indices = @transform_3, window_bounds = array<i64: 4, 8>}, {pipeline_mode = #tpu.pipeline_mode<synchronous>, transform_indices = @transform_4, window_bounds = array<i64: 4, 1>}, {transform_indices = @transform_5, window_bounds = array<i64: 1, 4, 256>}, {transform_indices = @transform_6, window_bounds = array<i64: 1, 4, 1>}, {transform_indices = @transform_7, window_bounds = array<i64: 1, 4, 1>}]} {
    %c0_i32 = arith.constant 0 : i32
    %0 = arith.cmpi eq, %arg1, %c0_i32 : i32
    %1 = arith.extui %0 : i1 to i32
    %c0_i32_0 = arith.constant 0 : i32
    %2 = arith.cmpi ne, %1, %c0_i32_0 : i32
    scf.if %2 {
      %cst_28 = arith.constant 0.000000e+00 : f32
      %38 = vector.broadcast %cst_28 : f32 to vector<1x4x1xf32>
      %c0_29 = arith.constant 0 : index
      %c0_30 = arith.constant 0 : index
      %c0_31 = arith.constant 0 : index
      %39 = vector.load %arg8[%c0_29, %c0_30, %c0_31] : memref<1x4x1xf32, #tpu.memory_space<vmem>>, vector<1x4x1xf32>
      tpu.vector_store %arg8[%c0_29, %c0_30, %c0_31], %38 {strides = array<i32>} : memref<1x4x1xf32, #tpu.memory_space<vmem>>, vector<1x4x1xf32>,
      %cst_32 = arith.constant 0.000000e+00 : f32
      %40 = vector.broadcast %cst_32 : f32 to vector<1x4x1xf32>
      %c0_33 = arith.constant 0 : index
      %c0_34 = arith.constant 0 : index
      %c0_35 = arith.constant 0 : index
      %41 = vector.load %arg9[%c0_33, %c0_34, %c0_35] : memref<1x4x1xf32, #tpu.memory_space<vmem>>, vector<1x4x1xf32>
      tpu.vector_store %arg9[%c0_33, %c0_34, %c0_35], %40 {strides = array<i32>} : memref<1x4x1xf32, #tpu.memory_space<vmem>>, vector<1x4x1xf32>,
    } else {
    }
    %c0 = arith.constant 0 : index
    %c0_1 = arith.constant 0 : index
    %c0_2 = arith.constant 0 : index
    %3 = vector.load %arg2[%c0, %c0_1, %c0_2] : memref<1x8x256xbf16, #tpu.memory_space<vmem>>, vector<1x8x256xbf16>
    %4 = vector.shape_cast %3 : vector<1x8x256xbf16> to vector<8x256xbf16>
    %5 = arith.extf %4 : vector<8x256xbf16> to vector<8x256xf32>
    %c0_3 = arith.constant 0 : index
    %c0_4 = arith.constant 0 : index
    %6 = vector.load %arg3[%c0_3, %c0_4] : memref<8x1xf32, #tpu.memory_space<vmem>>, vector<8x1xf32>
    %7 = vector.broadcast %6 : vector<8x1xf32> to vector<8x256xf32>
    %8 = arith.mulf %5, %7 : vector<8x256xf32>
    %c0_5 = arith.constant 0 : index
    %c0_6 = arith.constant 0 : index
    %9 = vector.load %arg4[%c0_5, %c0_6] : memref<8x1xf32, #tpu.memory_space<vmem>>, vector<8x1xf32>
    %10 = vector.broadcast %9 : vector<8x1xf32> to vector<8x256xf32>
    %11 = arith.addf %8, %10 : vector<8x256xf32>
    %c0_7 = arith.constant 0 : index
    %c0_8 = arith.constant 0 : index
    %12 = vector.load %arg5[%c0_7, %c0_8] : memref<4x8xbf16, #tpu.memory_space<vmem>>, vector<4x8xbf16>
    %13 = arith.truncf %11 : vector<8x256xf32> to vector<8x256xbf16>
    %cst = arith.constant dense<0.000000e+00> : vector<4x256xf32>
    %14 = tpu.matmul %12, %13, %cst {dimension_numbers = #tpu.dot_dimension_numbers<[1], [0], [0], [1], [0, 0, 1, 1], [], []>} : vector<4x8xbf16>, vector<8x256xbf16>, vector<4x256xf32> -> vector<4x256xf32>
    %c0_9 = arith.constant 0 : index
    %c0_10 = arith.constant 0 : index
    %15 = vector.load %arg6[%c0_9, %c0_10] : memref<4x1xf32, #tpu.memory_space<vmem>>, vector<4x1xf32>
    %16 = vector.broadcast %15 : vector<4x1xf32> to vector<4x256xf32>
    %17 = arith.addf %14, %16 : vector<4x256xf32>
    %c0_11 = arith.constant 0 : index
    %c0_12 = arith.constant 0 : index
    %c0_13 = arith.constant 0 : index
    %18 = vector.load %arg7[%c0_11, %c0_12, %c0_13] : memref<1x4x256xf32, #tpu.memory_space<vmem>>, vector<1x4x256xf32>
    %19 = vector.shape_cast %18 : vector<1x4x256xf32> to vector<4x256xf32>
    %20 = vector.shape_cast %17 : vector<4x256xf32> to vector<1x4x256xf32>
    tpu.vector_store %arg7[%c0_11, %c0_12, %c0_13], %20 {strides = array<i32>} : memref<1x4x256xf32, #tpu.memory_space<vmem>>, vector<1x4x256xf32>,
    %c0_14 = arith.constant 0 : index
    %c0_15 = arith.constant 0 : index
    %c0_16 = arith.constant 0 : index
    %21 = vector.load %arg8[%c0_14, %c0_15, %c0_16] : memref<1x4x1xf32, #tpu.memory_space<vmem>>, vector<1x4x1xf32>
    %22 = vector.shape_cast %21 : vector<1x4x1xf32> to vector<4x1xf32>
    %cst_17 = arith.constant dense<0.000000e+00> : vector<4xf32>
    %23 = vector.multi_reduction <add>, %17, %cst_17 [1] : vector<4x256xf32> to vector<4xf32>
    %24 = vector.shape_cast %23 : vector<4xf32> to vector<4x1xf32>
    %25 = arith.addf %22, %24 : vector<4x1xf32>
    %c0_18 = arith.constant 0 : index
    %c0_19 = arith.constant 0 : index
    %c0_20 = arith.constant 0 : index
    %26 = vector.load %arg8[%c0_18, %c0_19, %c0_20] : memref<1x4x1xf32, #tpu.memory_space<vmem>>, vector<1x4x1xf32>
    %27 = vector.shape_cast %26 : vector<1x4x1xf32> to vector<4x1xf32>
    %28 = vector.shape_cast %25 : vector<4x1xf32> to vector<1x4x1xf32>
    tpu.vector_store %arg8[%c0_18, %c0_19, %c0_20], %28 {strides = array<i32>} : memref<1x4x1xf32, #tpu.memory_space<vmem>>, vector<1x4x1xf32>,
    %c0_21 = arith.constant 0 : index
    %c0_22 = arith.constant 0 : index
    %c0_23 = arith.constant 0 : index
    %29 = vector.load %arg9[%c0_21, %c0_22, %c0_23] : memref<1x4x1xf32, #tpu.memory_space<vmem>>, vector<1x4x1xf32>
    %30 = vector.shape_cast %29 : vector<1x4x1xf32> to vector<4x1xf32>
    %31 = arith.mulf %17, %17 : vector<4x256xf32>
    %cst_24 = arith.constant dense<0.000000e+00> : vector<4xf32>
    %32 = vector.multi_reduction <add>, %31, %cst_24 [1] : vector<4x256xf32> to vector<4xf32>
    %33 = vector.shape_cast %32 : vector<4xf32> to vector<4x1xf32>
    %34 = arith.addf %30, %33 : vector<4x1xf32>
    %c0_25 = arith.constant 0 : index
    %c0_26 = arith.constant 0 : index
    %c0_27 = arith.constant 0 : index
    %35 = vector.load %arg9[%c0_25, %c0_26, %c0_27] : memref<1x4x1xf32, #tpu.memory_space<vmem>>, vector<1x4x1xf32>
    %36 = vector.shape_cast %35 : vector<1x4x1xf32> to vector<4x1xf32>
    %37 = vector.shape_cast %34 : vector<4x1xf32> to vector<1x4x1xf32>
    tpu.vector_store %arg9[%c0_25, %c0_26, %c0_27], %37 {strides = array<i32>} : memref<1x4x1xf32, #tpu.memory_space<vmem>>, vector<1x4x1xf32>,
    return
  }
  func.func @transform_0(%arg0: i32, %arg1: i32) -> (i32, i32, i32) {
    %c0_i32 = arith.constant 0 : i32
    %c0_i32_0 = arith.constant 0 : i32
    return %arg0, %c0_i32, %arg1 : i32, i32, i32
  }
  func.func @transform_1(%arg0: i32, %arg1: i32) -> (i32, i32) {
    %c0_i32 = arith.constant 0 : i32
    %c0_i32_0 = arith.constant 0 : i32
    %c0_i32_1 = arith.constant 0 : i32
    return %c0_i32, %c0_i32_0 : i32, i32
  }
  func.func @transform_2(%arg0: i32, %arg1: i32) -> (i32, i32) {
    %c0_i32 = arith.constant 0 : i32
    %c0_i32_0 = arith.constant 0 : i32
    %c0_i32_1 = arith.constant 0 : i32
    return %c0_i32, %c0_i32_0 : i32, i32
  }
  func.func @transform_3(%arg0: i32, %arg1: i32) -> (i32, i32) {
    %c0_i32 = arith.constant 0 : i32
    %c0_i32_0 = arith.constant 0 : i32
    %c0_i32_1 = arith.constant 0 : i32
    return %c0_i32, %c0_i32_0 : i32, i32
  }
  func.func @transform_4(%arg0: i32, %arg1: i32) -> (i32, i32) {
    %c0_i32 = arith.constant 0 : i32
    %c0_i32_0 = arith.constant 0 : i32
    %c0_i32_1 = arith.constant 0 : i32
    return %c0_i32, %c0_i32_0 : i32, i32
  }
  func.func @transform_5(%arg0: i32, %arg1: i32) -> (i32, i32, i32) {
    %c0_i32 = arith.constant 0 : i32
    %c0_i32_0 = arith.constant 0 : i32
    return %arg0, %c0_i32, %arg1 : i32, i32, i32
  }
  func.func @transform_6(%arg0: i32, %arg1: i32) -> (i32, i32, i32) {
    %c0_i32 = arith.constant 0 : i32
    %c0_i32_0 = arith.constant 0 : i32
    %c0_i32_1 = arith.constant 0 : i32
    return %arg0, %c0_i32, %c0_i32_0 : i32, i32, i32
  }
  func.func @transform_7(%arg0: i32, %arg1: i32) -> (i32, i32, i32) {
    %c0_i32 = arith.constant 0 : i32
    %c0_i32_0 = arith.constant 0 : i32
    %c0_i32_1 = arith.constant 0 : i32
    return %arg0, %c0_i32, %c0_i32_0 : i32, i32, i32
  }
}

module attributes {stable_mosaic.version = 11 : i64} {
  func.func @_bn_relu_kernel(%arg0: i32, %arg1: i32, %arg2: memref<1x4x256xf32, #tpu.memory_space<vmem>>, %arg3: memref<4x1xf32, #tpu.memory_space<vmem>>, %arg4: memref<4x1xf32, #tpu.memory_space<vmem>>, %arg5: memref<1x4x256xf32, #tpu.memory_space<vmem>>) attributes {dimension_semantics = [#tpu.dimension_semantics<parallel>, #tpu.dimension_semantics<parallel>], iteration_bounds = array<i64: 2, 1>, scalar_prefetch = 0 : i64, scratch_operands = 0 : i64, tpu.core_type = #tpu.core_type<tc>, window_params = [{transform_indices = @transform_0, window_bounds = array<i64: 1, 4, 256>}, {pipeline_mode = #tpu.pipeline_mode<synchronous>, transform_indices = @transform_1, window_bounds = array<i64: 4, 1>}, {pipeline_mode = #tpu.pipeline_mode<synchronous>, transform_indices = @transform_2, window_bounds = array<i64: 4, 1>}, {transform_indices = @transform_3, window_bounds = array<i64: 1, 4, 256>}]} {
    %c0 = arith.constant 0 : index
    %c0_0 = arith.constant 0 : index
    %c0_1 = arith.constant 0 : index
    %0 = vector.load %arg2[%c0, %c0_0, %c0_1] : memref<1x4x256xf32, #tpu.memory_space<vmem>>, vector<1x4x256xf32>
    %1 = vector.shape_cast %0 : vector<1x4x256xf32> to vector<4x256xf32>
    %c0_2 = arith.constant 0 : index
    %c0_3 = arith.constant 0 : index
    %2 = vector.load %arg3[%c0_2, %c0_3] : memref<4x1xf32, #tpu.memory_space<vmem>>, vector<4x1xf32>
    %3 = vector.broadcast %2 : vector<4x1xf32> to vector<4x256xf32>
    %4 = arith.mulf %1, %3 : vector<4x256xf32>
    %c0_4 = arith.constant 0 : index
    %c0_5 = arith.constant 0 : index
    %5 = vector.load %arg4[%c0_4, %c0_5] : memref<4x1xf32, #tpu.memory_space<vmem>>, vector<4x1xf32>
    %6 = vector.broadcast %5 : vector<4x1xf32> to vector<4x256xf32>
    %7 = arith.addf %4, %6 : vector<4x256xf32>
    %cst = arith.constant 0.000000e+00 : f32
    %8 = vector.broadcast %cst : f32 to vector<4x256xf32>
    %9 = arith.maximumf %7, %8 : vector<4x256xf32>
    %c0_6 = arith.constant 0 : index
    %c0_7 = arith.constant 0 : index
    %c0_8 = arith.constant 0 : index
    %10 = vector.load %arg5[%c0_6, %c0_7, %c0_8] : memref<1x4x256xf32, #tpu.memory_space<vmem>>, vector<1x4x256xf32>
    %11 = vector.shape_cast %10 : vector<1x4x256xf32> to vector<4x256xf32>
    %12 = vector.shape_cast %9 : vector<4x256xf32> to vector<1x4x256xf32>
    tpu.vector_store %arg5[%c0_6, %c0_7, %c0_8], %12 {strides = array<i32>} : memref<1x4x256xf32, #tpu.memory_space<vmem>>, vector<1x4x256xf32>,
    return
  }
  func.func @transform_0(%arg0: i32, %arg1: i32) -> (i32, i32, i32) {
    %c0_i32 = arith.constant 0 : i32
    %c0_i32_0 = arith.constant 0 : i32
    return %arg0, %c0_i32, %arg1 : i32, i32, i32
  }
  func.func @transform_1(%arg0: i32, %arg1: i32) -> (i32, i32) {
    %c0_i32 = arith.constant 0 : i32
    %c0_i32_0 = arith.constant 0 : i32
    %c0_i32_1 = arith.constant 0 : i32
    return %c0_i32, %c0_i32_0 : i32, i32
  }
  func.func @transform_2(%arg0: i32, %arg1: i32) -> (i32, i32) {
    %c0_i32 = arith.constant 0 : i32
    %c0_i32_0 = arith.constant 0 : i32
    %c0_i32_1 = arith.constant 0 : i32
    return %c0_i32, %c0_i32_0 : i32, i32
  }
  func.func @transform_3(%arg0: i32, %arg1: i32) -> (i32, i32, i32) {
    %c0_i32 = arith.constant 0 : i32
    %c0_i32_0 = arith.constant 0 : i32
    return %arg0, %c0_i32, %arg1 : i32, i32, i32
  }
}

</mosaic_0001>

<llo_original>
// kernel: _lambda_.6
$region0: #{_lambda_.6}
  #allocation0 [shape = 'u32[]', space=smem, size = 0x4, offset = 0x4, fixed_abs, tag = 'smem constant byte address 0x4 - core index']
  #allocation1 [shape = 'u32[72,128]{1,0:T(1,128)}', space=vmem, size = 0x9000, scoped, tag = 'internal scratch']
  %s0 = inlined_call_operand.vmem [shape: f32[2,2,8,8], index: 0, kind: input, shape index: {}]
  %s1 = inlined_call_operand.vmem [shape: f32[16,8], index: 1, kind: input, shape index: {}]
  %s2 = inlined_call_operand.vmem [shape: f32[8,16], index: 2, kind: input, shape index: {}]
  %s3 = inlined_call_operand.vmem [shape: f32[2,2,16,16], index: 3, kind: output, shape index: {}]
  %s4 = sld [smem:[#allocation0]]
  $region45: #{_lambda_.6} parent=0
    _
  %s6 = ssub.s32 1, %s4
  %s7 = scalar_select 0, %s6, %s4
  loop: start=0, step=1, limit=4
  $region2: #{_lambda_.6} parent=0 // loop_pre_header
    _
  $region3: #{_lambda_.6} parent=0 // loop_header
    %s9 = sphi 0, %s13
    %p10 = scmp.ge.s32.totalorder %s9, 4
    %s19 = sphi 0, %s21
    %s22 = sphi 0, %s19
    %s23 = sphi 0, %s22
    %s39 = sphi 0, %s23
    %s43 = sphi 0, %s43
    %s45 = sphi 0, %s43
    %s46 = sphi 0, %s45
    %s60 = sphi 0, %s46
    %s64 = sphi 0, %s64
    %s66 = sphi 0, %s64
    %s67 = sphi 0, %s66
    %s81 = sphi 0, %s67
    %s87 = sphi 0, %s89
    %s90 = sphi 0, %s87
    %s91 = sphi 0, %s90
    %s107 = sphi 0, %s91
  $region4: #{_lambda_.6} parent=0 // loop_header_branch
    %12 = sbr.rel (%p10) target = $region8
  $region5: #{_lambda_.6} parent=0 // loop_body
    %s14 = ssub.s32 %s9, 1
    %s15 = ssub.s32 %s9, 2
    %s16 = sadd.s32 %s9, 1
    %s17 = ssub.s32 %s9, %s16
    %p18 = scmp.eq.s32.totalorder %s17, 0
    %s20 = sadd.s32 %s19, 1
    %s21 = scalar_select %p18, %s19, %s20
    %p24 = pneg %p18
    %p25 = scmp.eq.s32.totalorder %s9, 1
    %p26 = por %p24, %p25
    %p27 = scmp.ne.s32.totalorder %s19, %s22
    %p28 = scmp.eq.s32.totalorder %s9, 0
    %p29 = por %p27, %p28
    %p30 = scmp.ne.s32.totalorder %s19, %s22
    %p31 = scmp.eq.s32.totalorder %s14, 1
    %p32 = por %p30, %p31
    %p33 = scmp.ne.s32.totalorder %s22, %s23
    %p34 = scmp.eq.s32.totalorder %s14, 0
    %p35 = por %p33, %p34
    %p36 = scmp.ne.s32.totalorder %s22, %s23
    %p37 = scmp.eq.s32.totalorder %s15, 1
    %p38 = por %p36, %p37
    %p40 = scmp.ne.s32.totalorder %s23, %s39
    %p41 = scmp.eq.s32.totalorder %s15, 0
    %p42 = por %p40, %p41
    %s44 = sadd.s32 %s43, 1
    %p47 = scmp.eq.s32.totalorder %s9, 1
    %p48 = scmp.ne.s32.totalorder %s43, %s45
    %p49 = scmp.eq.s32.totalorder %s9, 0
    %p50 = por %p48, %p49
    %p51 = scmp.ne.s32.totalorder %s43, %s45
    %p52 = scmp.eq.s32.totalorder %s14, 1
    %p53 = por %p51, %p52
    %p54 = scmp.ne.s32.totalorder %s45, %s46
    %p55 = scmp.eq.s32.totalorder %s14, 0
    %p56 = por %p54, %p55
    %p57 = scmp.ne.s32.totalorder %s45, %s46
    %p58 = scmp.eq.s32.totalorder %s15, 1
    %p59 = por %p57, %p58
    %p61 = scmp.ne.s32.totalorder %s46, %s60
    %p62 = scmp.eq.s32.totalorder %s15, 0
    %p63 = por %p61, %p62
    %s65 = sadd.s32 %s64, 1
    %p68 = scmp.eq.s32.totalorder %s9, 1
    %p69 = scmp.ne.s32.totalorder %s64, %s66
    %p70 = scmp.eq.s32.totalorder %s9, 0
    %p71 = por %p69, %p70
    %p72 = scmp.ne.s32.totalorder %s64, %s66
    %p73 = scmp.eq.s32.totalorder %s14, 1
    %p74 = por %p72, %p73
    %p75 = scmp.ne.s32.totalorder %s66, %s67
    %p76 = scmp.eq.s32.totalorder %s14, 0
    %p77 = por %p75, %p76
    %p78 = scmp.ne.s32.totalorder %s66, %s67
    %p79 = scmp.eq.s32.totalorder %s15, 1
    %p80 = por %p78, %p79
    %p82 = scmp.ne.s32.totalorder %s67, %s81
    %p83 = scmp.eq.s32.totalorder %s15, 0
    %p84 = por %p82, %p83
    %s85 = ssub.s32 %s9, %s16
    %p86 = scmp.eq.s32.totalorder %s85, 0
    %s88 = sadd.s32 %s87, 1
    %s89 = scalar_select %p86, %s87, %s88
    %p92 = pneg %p86
    %p93 = scmp.eq.s32.totalorder %s9, 1
    %p94 = por %p92, %p93
    %p95 = scmp.ne.s32.totalorder %s87, %s90
    %p96 = scmp.eq.s32.totalorder %s9, 0
    %p97 = por %p95, %p96
    %p98 = scmp.ne.s32.totalorder %s87, %s90
    %p99 = scmp.eq.s32.totalorder %s14, 1
    %p100 = por %p98, %p99
    %p101 = scmp.ne.s32.totalorder %s90, %s91
    %p102 = scmp.eq.s32.totalorder %s14, 0
    %p103 = por %p101, %p102
    %p104 = scmp.ne.s32.totalorder %s90, %s91
    %p105 = scmp.eq.s32.totalorder %s15, 1
    %p106 = por %p104, %p105
    %p108 = scmp.ne.s32.totalorder %s91, %s107
    %p109 = scmp.eq.s32.totalorder %s15, 0
    %p110 = por %p108, %p109
    %p111 = scmp.le.s32.totalorder 1, %s9
    %p112 = scmp.lt.s32.totalorder %s9, 3
    %p113 = pnand %p111, %p112
    %p114 = pneg %p113
    // Predicated region
    $region9: #{_lambda_.6} parent=5 // pred_check
      _
    $region10: #{_lambda_.6} parent=5 // pred_check_branch
      %116 = sbr.rel (%p113) target = $region12
    $region11: #{_lambda_.6} parent=5 // pred_region
      %s117 = ssub.s32 %s9, 1
      // Predicated region
      $region13: #{_lambda_.6} parent=11 // pred_check
        %p118 = pneg %p56
      $region14: #{_lambda_.6} parent=11 // pred_check_branch
        %120 = sbr.rel (%p118) target = $region16
      $region15: #{_lambda_.6} parent=11 // pred_region
        _
      $region16: #{_lambda_.6} parent=11 // pred_fallthru
        _
      // Predicated region
      $region17: #{_lambda_.6} parent=11 // pred_check
        %p121 = pneg %p77
      $region18: #{_lambda_.6} parent=11 // pred_check_branch
        %123 = sbr.rel (%p121) target = $region20
      $region19: #{_lambda_.6} parent=11 // pred_region
        _
      $region20: #{_lambda_.6} parent=11 // pred_fallthru
        _
    $region12: #{_lambda_.6} parent=5 // pred_fallthru
      _
    %p124 = scmp.lt.s32.totalorder %s9, 2
    // Predicated region
    $region21: #{_lambda_.6} parent=5 // pred_check
      %p125 = pneg %p124
    $region22: #{_lambda_.6} parent=5 // pred_check_branch
      %127 = sbr.rel (%p125) target = $region24
    $region23: #{_lambda_.6} parent=5 // pred_region
      // Predicated region
      $region25: #{_lambda_.6} parent=23 // pred_check
        %p128 = pneg %p29
      $region26: #{_lambda_.6} parent=23 // pred_check_branch
        %130 = sbr.rel (%p128) target = $region28
      $region27: #{_lambda_.6} parent=23 // pred_region
        %p131 = scmp.lt.s32.totalorder %s9, 1
        %s132 = scalar_select %p131, %s9, 1
        %s133 = smul.addr %s132, 2
        %s134 = smul.addr %s133, 8
        %s135 = scalar_lea.vmem %s0, %s134
      $region28: #{_lambda_.6} parent=23 // pred_fallthru
        _
    $region24: #{_lambda_.6} parent=5 // pred_fallthru
      _
    %p136 = scmp.le.s32.totalorder 1, %s9
    %p137 = scmp.lt.s32.totalorder %s9, 3
    %p138 = pnand %p136, %p137
    %p139 = pneg %p138
    // Predicated region
    $region29: #{_lambda_.6} parent=5 // pred_check
      _
    $region30: #{_lambda_.6} parent=5 // pred_check_branch
      %141 = sbr.rel (%p138) target = $region32
    $region31: #{_lambda_.6} parent=5 // pred_region
      %s142 = ssub.s32 %s9, 1
      %p143 = scmp.lt.s32.totalorder %s14, 1
      %s144 = scalar_select %p143, %s14, 1
      %s145 = smul.addr %s144, 2
      %s146 = smul.addr %s145, 8
      %s147 = scalar_lea.vmem %s0, %s146
      %p148 = pneg %p35
      %p149 = pneg %p32
      %p150 = pneg %p56
      %p151 = pneg %p53
      %p152 = pneg %p77
      %p153 = pneg %p74
      %p154 = pneg %p103
      %p155 = pneg %p100
      %p156 = scmp.lt.s32.totalorder %s14, 1
      %s157 = scalar_select %p156, %s14, 1
      %s158 = smul.addr %s157, 4
      %s159 = smul.addr %s158, 8
      %s160 = scalar_lea.vmem %s3, %s159
      %p161 = scmp.lt.s32.totalorder %s14, 1
      %s162 = scalar_select %p161, %s14, 1
      %s163 = smul.addr %s162, 2
      %s164 = smul.addr %s163, 8
      %s165 = scalar_lea.vmem %s0, %s164
      %p166 = scmp.lt.s32.totalorder %s14, 1
      %s167 = scalar_select %p166, %s14, 1
      %s168 = smul.addr %s167, 4
      %s169 = smul.addr %s168, 8
      %s170 = scalar_lea.vmem %s3, %s169
      %v171 = vld [vmem:[%s1] sm:$0xff]
      %v172 = vld [vmem:[%s1 + $0x8] sm:$0xff]
      %v173 = vld [vmem:[%s165] sm:$0xff]
      %vm174 = vcmask 64512
      %v176 = vsel %vm174, %v171, 0
      %v179 = vsel %vm174, %v172, 0
      %181 = vmatpush.msra.mxu0 0.0
      %182 = vmatpush.msra.mxu0 0.0
      %183 = vmatpush.msra.mxu0 0.0
      %184 = vmatpush.msra.mxu0 0.0
      %185 = vmatpush.msra.mxu0 0.0
      %186 = vmatpush.msra.mxu0 0.0
      %187 = vmatpush.msra.mxu0 0.0
      %188 = vmatpush.msra.mxu0 0.0
      %189 = vmatpush.msra.mxu0 0.0
      %190 = vmatpush.msra.mxu0 0.0
      %191 = vmatpush.msra.mxu0 0.0
      %192 = vmatpush.msra.mxu0 0.0
      %193 = vmatpush.msra.mxu0 0.0
      %194 = vmatpush.msra.mxu0 0.0
      %195 = vmatpush.msra.mxu0 0.0
      %196 = vmatpush.msra.mxu0 %v173
      %197 = vmatmul.f32.gmra.mxu0 %v176
      %v198 = vpop.f32.mrf.mxu0
      %v199 = vadd.f32 0.0, %v198
      %200 = vmatmul.f32.gmra.mxu0 %v179
      %v201 = vpop.f32.mrf.mxu0
      %v202 = vadd.f32 0.0, %v201
      %203 = vdwg.mxu0
      %v204 = vld [vmem:[%s2] sm:$0xff]
      %v206 = vsel %vm174, %v199, 0
      %v209 = vsel %vm174, %v202, 0
      %211 = vmatpush.msra.mxu0 0.0
      %212 = vmatpush.msra.mxu0 0.0
      %213 = vmatpush.msra.mxu0 0.0
      %214 = vmatpush.msra.mxu0 0.0
      %215 = vmatpush.msra.mxu0 0.0
      %216 = vmatpush.msra.mxu0 0.0
      %217 = vmatpush.msra.mxu0 0.0
      %218 = vmatpush.msra.mxu0 0.0
      %219 = vmatpush.msra.mxu0 0.0
      %220 = vmatpush.msra.mxu0 0.0
      %221 = vmatpush.msra.mxu0 0.0
      %222 = vmatpush.msra.mxu0 0.0
      %223 = vmatpush.msra.mxu0 0.0
      %224 = vmatpush.msra.mxu0 0.0
      %225 = vmatpush.msra.mxu0 0.0
      %226 = vmatpush.msra.mxu0 %v204
      %227 = vmatmul.f32.gmra.mxu0 %v206
      %v228 = vpop.f32.mrf.mxu0
      %v229 = vadd.f32 0.0, %v228
      %230 = vmatmul.f32.gmra.mxu0 %v209
      %v231 = vpop.f32.mrf.mxu0
      %v232 = vadd.f32 0.0, %v231
      %233 = vdwg.mxu0
      %vm234 = vcmask 130048
      %235 = vst.msk [vmem:[%s170] sm:$0xff] %vm234, %v229
      %236 = vst.msk [vmem:[%s170 + $0x8] sm:$0xff] %vm234, %v232
      %v237 = vld [vmem:[%s1] sm:$0xff]
      %v238 = vld [vmem:[%s1 + $0x8] sm:$0xff]
      %s239 = scalar_lea.vmem %s165, 8
      %v240 = vld [vmem:[%s239] sm:$0xff]
      %v242 = vsel %vm174, %v237, 0
      %v245 = vsel %vm174, %v238, 0
      %247 = vmatpush.msra.mxu0 0.0
      %248 = vmatpush.msra.mxu0 0.0
      %249 = vmatpush.msra.mxu0 0.0
      %250 = vmatpush.msra.mxu0 0.0
      %251 = vmatpush.msra.mxu0 0.0
      %252 = vmatpush.msra.mxu0 0.0
      %253 = vmatpush.msra.mxu0 0.0
      %254 = vmatpush.msra.mxu0 0.0
      %255 = vmatpush.msra.mxu0 0.0
      %256 = vmatpush.msra.mxu0 0.0
      %257 = vmatpush.msra.mxu0 0.0
      %258 = vmatpush.msra.mxu0 0.0
      %259 = vmatpush.msra.mxu0 0.0
      %260 = vmatpush.msra.mxu0 0.0
      %261 = vmatpush.msra.mxu0 0.0
      %262 = vmatpush.msra.mxu0 %v240
      %263 = vmatmul.f32.gmra.mxu0 %v242
      %v264 = vpop.f32.mrf.mxu0
      %v265 = vadd.f32 0.0, %v264
      %266 = vmatmul.f32.gmra.mxu0 %v245
      %v267 = vpop.f32.mrf.mxu0
      %v268 = vadd.f32 0.0, %v267
      %269 = vdwg.mxu0
      %v270 = vld [vmem:[%s2] sm:$0xff]
      %v272 = vsel %vm174, %v265, 0
      %v275 = vsel %vm174, %v268, 0
      %277 = vmatpush.msra.mxu0 0.0
      %278 = vmatpush.msra.mxu0 0.0
      %279 = vmatpush.msra.mxu0 0.0
      %280 = vmatpush.msra.mxu0 0.0
      %281 = vmatpush.msra.mxu0 0.0
      %282 = vmatpush.msra.mxu0 0.0
      %283 = vmatpush.msra.mxu0 0.0
      %284 = vmatpush.msra.mxu0 0.0
      %285 = vmatpush.msra.mxu0 0.0
      %286 = vmatpush.msra.mxu0 0.0
      %287 = vmatpush.msra.mxu0 0.0
      %288 = vmatpush.msra.mxu0 0.0
      %289 = vmatpush.msra.mxu0 0.0
      %290 = vmatpush.msra.mxu0 0.0
      %291 = vmatpush.msra.mxu0 0.0
      %292 = vmatpush.msra.mxu0 %v270
      %293 = vmatmul.f32.gmra.mxu0 %v272
      %v294 = vpop.f32.mrf.mxu0
      %v295 = vadd.f32 0.0, %v294
      %296 = vmatmul.f32.gmra.mxu0 %v275
      %v297 = vpop.f32.mrf.mxu0
      %v298 = vadd.f32 0.0, %v297
      %299 = vdwg.mxu0
      %s300 = scalar_lea.vmem %s170, 16
      %301 = vst.msk [vmem:[%s300] sm:$0xff] %vm234, %v295
      %302 = vst.msk [vmem:[%s300 + $0x8] sm:$0xff] %vm234, %v298
      %p303 = scmp.lt.s32.totalorder %s14, 1
      %s304 = scalar_select %p303, %s14, 1
      %s305 = smul.addr %s304, 4
      %s306 = smul.addr %s305, 8
      %s307 = scalar_lea.vmem %s3, %s306
      // Predicated region
      $region33: #{_lambda_.6} parent=31 // pred_check
        %p308 = pneg %p100
      $region34: #{_lambda_.6} parent=31 // pred_check_branch
        %310 = sbr.rel (%p308) target = $region36
      $region35: #{_lambda_.6} parent=31 // pred_region
        _
      $region36: #{_lambda_.6} parent=31 // pred_fallthru
        _
    $region32: #{_lambda_.6} parent=5 // pred_fallthru
      _
    %p311 = scmp.le.s32.totalorder 2, %s9
    // Predicated region
    $region37: #{_lambda_.6} parent=5 // pred_check
      %p312 = pneg %p311
    $region38: #{_lambda_.6} parent=5 // pred_check_branch
      %314 = sbr.rel (%p312) target = $region40
    $region39: #{_lambda_.6} parent=5 // pred_region
      %s315 = ssub.s32 %s9, 2
      // Predicated region
      $region41: #{_lambda_.6} parent=39 // pred_check
        %p316 = pneg %p106
      $region42: #{_lambda_.6} parent=39 // pred_check_branch
        %318 = sbr.rel (%p316) target = $region44
      $region43: #{_lambda_.6} parent=39 // pred_region
        %p319 = scmp.lt.s32.totalorder %s15, 1
        %s320 = scalar_select %p319, %s15, 1
        %s321 = smul.addr %s320, 4
        %s322 = smul.addr %s321, 8
        %s323 = scalar_lea.vmem %s3, %s322
      $region44: #{_lambda_.6} parent=39 // pred_fallthru
        _
    $region40: #{_lambda_.6} parent=5 // pred_fallthru
      _
  $region6: #{_lambda_.6} parent=0 // loop_footer
    %s13 = sadd.s32 1, %s9
  $region7: #{_lambda_.6} parent=0 // loop_footer_branch
    %8 = sbr.rel target = $region3
  $region8: #{_lambda_.6} parent=0 // loop_exit
    _

// kernel: _lambda_.5
$region0: #{_lambda_.5}
  #allocation0 [shape = 'u32[]', space=smem, size = 0x4, offset = 0x4, fixed_abs, tag = 'smem constant byte address 0x4 - core index']
  #allocation1 [shape = 'u32[72,128]{1,0:T(1,128)}', space=vmem, size = 0x9000, scoped, tag = 'internal scratch']
  %s0 = inlined_call_operand.vmem [shape: bf16[2,16,64], index: 0, kind: input, shape index: {}]
  %s1 = inlined_call_operand.vmem [shape: bf16[2,6,64], index: 1, kind: input, shape index: {}]
  %s2 = inlined_call_operand.vmem [shape: bf16[8,16], index: 2, kind: input, shape index: {}]
  %s3 = inlined_call_operand.vmem [shape: bf16[8,6], index: 3, kind: input, shape index: {}]
  %s4 = inlined_call_operand.vmem [shape: f32[8,1], index: 4, kind: input, shape index: {}]
  %s5 = inlined_call_operand.vmem [shape: f32[2,8], index: 5, kind: input, shape index: {}]
  %s6 = inlined_call_operand.vmem [shape: f32[2,1], index: 6, kind: input, shape index: {}]
  %s7 = inlined_call_operand.vmem [shape: f32[2,2,64], index: 7, kind: output, shape index: {}]
  %s8 = sld [smem:[#allocation0]]
  $region61: #{_lambda_.5} parent=0
    _
  %s10 = ssub.s32 1, %s8
  %s11 = scalar_select 0, %s10, %s8
  loop: start=0, step=1, limit=4
  $region2: #{_lambda_.5} parent=0 // loop_pre_header
    _
  $region3: #{_lambda_.5} parent=0 // loop_header
    %s13 = sphi 0, %s17
    %p14 = scmp.ge.s32.totalorder %s13, 4
    %s23 = sphi 0, %s25
    %s26 = sphi 0, %s23
    %s27 = sphi 0, %s26
    %s43 = sphi 0, %s27
    %s49 = sphi 0, %s51
    %s52 = sphi 0, %s49
    %s53 = sphi 0, %s52
    %s69 = sphi 0, %s53
    %s73 = sphi 0, %s73
    %s75 = sphi 0, %s73
    %s76 = sphi 0, %s75
    %s90 = sphi 0, %s76
    %s94 = sphi 0, %s94
    %s96 = sphi 0, %s94
    %s97 = sphi 0, %s96
    %s111 = sphi 0, %s97
    %s115 = sphi 0, %s115
    %s117 = sphi 0, %s115
    %s118 = sphi 0, %s117
    %s132 = sphi 0, %s118
    %s136 = sphi 0, %s136
    %s138 = sphi 0, %s136
    %s139 = sphi 0, %s138
    %s153 = sphi 0, %s139
    %s157 = sphi 0, %s157
    %s159 = sphi 0, %s157
    %s160 = sphi 0, %s159
    %s174 = sphi 0, %s160
    %s180 = sphi 0, %s182
    %s183 = sphi 0, %s180
    %s184 = sphi 0, %s183
    %s200 = sphi 0, %s184
  $region4: #{_lambda_.5} parent=0 // loop_header_branch
    %16 = sbr.rel (%p14) target = $region8
  $region5: #{_lambda_.5} parent=0 // loop_body
    %s18 = ssub.s32 %s13, 1
    %s19 = ssub.s32 %s13, 2
    %s20 = sadd.s32 %s13, 1
    %s21 = ssub.s32 %s13, %s20
    %p22 = scmp.eq.s32.totalorder %s21, 0
    %s24 = sadd.s32 %s23, 1
    %s25 = scalar_select %p22, %s23, %s24
    %p28 = pneg %p22
    %p29 = scmp.eq.s32.totalorder %s13, 1
    %p30 = por %p28, %p29
    %p31 = scmp.ne.s32.totalorder %s23, %s26
    %p32 = scmp.eq.s32.totalorder %s13, 0
    %p33 = por %p31, %p32
    %p34 = scmp.ne.s32.totalorder %s23, %s26
    %p35 = scmp.eq.s32.totalorder %s18, 1
    %p36 = por %p34, %p35
    %p37 = scmp.ne.s32.totalorder %s26, %s27
    %p38 = scmp.eq.s32.totalorder %s18, 0
    %p39 = por %p37, %p38
    %p40 = scmp.ne.s32.totalorder %s26, %s27
    %p41 = scmp.eq.s32.totalorder %s19, 1
    %p42 = por %p40, %p41
    %p44 = scmp.ne.s32.totalorder %s27, %s43
    %p45 = scmp.eq.s32.totalorder %s19, 0
    %p46 = por %p44, %p45
    %s47 = ssub.s32 %s13, %s20
    %p48 = scmp.eq.s32.totalorder %s47, 0
    %s50 = sadd.s32 %s49, 1
    %s51 = scalar_select %p48, %s49, %s50
    %p54 = pneg %p48
    %p55 = scmp.eq.s32.totalorder %s13, 1
    %p56 = por %p54, %p55
    %p57 = scmp.ne.s32.totalorder %s49, %s52
    %p58 = scmp.eq.s32.totalorder %s13, 0
    %p59 = por %p57, %p58
    %p60 = scmp.ne.s32.totalorder %s49, %s52
    %p61 = scmp.eq.s32.totalorder %s18, 1
    %p62 = por %p60, %p61
    %p63 = scmp.ne.s32.totalorder %s52, %s53
    %p64 = scmp.eq.s32.totalorder %s18, 0
    %p65 = por %p63, %p64
    %p66 = scmp.ne.s32.totalorder %s52, %s53
    %p67 = scmp.eq.s32.totalorder %s19, 1
    %p68 = por %p66, %p67
    %p70 = scmp.ne.s32.totalorder %s53, %s69
    %p71 = scmp.eq.s32.totalorder %s19, 0
    %p72 = por %p70, %p71
    %s74 = sadd.s32 %s73, 1
    %p77 = scmp.eq.s32.totalorder %s13, 1
    %p78 = scmp.ne.s32.totalorder %s73, %s75
    %p79 = scmp.eq.s32.totalorder %s13, 0
    %p80 = por %p78, %p79
    %p81 = scmp.ne.s32.totalorder %s73, %s75
    %p82 = scmp.eq.s32.totalorder %s18, 1
    %p83 = por %p81, %p82
    %p84 = scmp.ne.s32.totalorder %s75, %s76
    %p85 = scmp.eq.s32.totalorder %s18, 0
    %p86 = por %p84, %p85
    %p87 = scmp.ne.s32.totalorder %s75, %s76
    %p88 = scmp.eq.s32.totalorder %s19, 1
    %p89 = por %p87, %p88
    %p91 = scmp.ne.s32.totalorder %s76, %s90
    %p92 = scmp.eq.s32.totalorder %s19, 0
    %p93 = por %p91, %p92
    %s95 = sadd.s32 %s94, 1
    %p98 = scmp.eq.s32.totalorder %s13, 1
    %p99 = scmp.ne.s32.totalorder %s94, %s96
    %p100 = scmp.eq.s32.totalorder %s13, 0
    %p101 = por %p99, %p100
    %p102 = scmp.ne.s32.totalorder %s94, %s96
    %p103 = scmp.eq.s32.totalorder %s18, 1
    %p104 = por %p102, %p103
    %p105 = scmp.ne.s32.totalorder %s96, %s97
    %p106 = scmp.eq.s32.totalorder %s18, 0
    %p107 = por %p105, %p106
    %p108 = scmp.ne.s32.totalorder %s96, %s97
    %p109 = scmp.eq.s32.totalorder %s19, 1
    %p110 = por %p108, %p109
    %p112 = scmp.ne.s32.totalorder %s97, %s111
    %p113 = scmp.eq.s32.totalorder %s19, 0
    %p114 = por %p112, %p113
    %s116 = sadd.s32 %s115, 1
    %p119 = scmp.eq.s32.totalorder %s13, 1
    %p120 = scmp.ne.s32.totalorder %s115, %s117
    %p121 = scmp.eq.s32.totalorder %s13, 0
    %p122 = por %p120, %p121
    %p123 = scmp.ne.s32.totalorder %s115, %s117
    %p124 = scmp.eq.s32.totalorder %s18, 1
    %p125 = por %p123, %p124
    %p126 = scmp.ne.s32.totalorder %s117, %s118
    %p127 = scmp.eq.s32.totalorder %s18, 0
    %p128 = por %p126, %p127
    %p129 = scmp.ne.s32.totalorder %s117, %s118
    %p130 = scmp.eq.s32.totalorder %s19, 1
    %p131 = por %p129, %p130
    %p133 = scmp.ne.s32.totalorder %s118, %s132
    %p134 = scmp.eq.s32.totalorder %s19, 0
    %p135 = por %p133, %p134
    %s137 = sadd.s32 %s136, 1
    %p140 = scmp.eq.s32.totalorder %s13, 1
    %p141 = scmp.ne.s32.totalorder %s136, %s138
    %p142 = scmp.eq.s32.totalorder %s13, 0
    %p143 = por %p141, %p142
    %p144 = scmp.ne.s32.totalorder %s136, %s138
    %p145 = scmp.eq.s32.totalorder %s18, 1
    %p146 = por %p144, %p145
    %p147 = scmp.ne.s32.totalorder %s138, %s139
    %p148 = scmp.eq.s32.totalorder %s18, 0
    %p149 = por %p147, %p148
    %p150 = scmp.ne.s32.totalorder %s138, %s139
    %p151 = scmp.eq.s32.totalorder %s19, 1
    %p152 = por %p150, %p151
    %p154 = scmp.ne.s32.totalorder %s139, %s153
    %p155 = scmp.eq.s32.totalorder %s19, 0
    %p156 = por %p154, %p155
    %s158 = sadd.s32 %s157, 1
    %p161 = scmp.eq.s32.totalorder %s13, 1
    %p162 = scmp.ne.s32.totalorder %s157, %s159
    %p163 = scmp.eq.s32.totalorder %s13, 0
    %p164 = por %p162, %p163
    %p165 = scmp.ne.s32.totalorder %s157, %s159
    %p166 = scmp.eq.s32.totalorder %s18, 1
    %p167 = por %p165, %p166
    %p168 = scmp.ne.s32.totalorder %s159, %s160
    %p169 = scmp.eq.s32.totalorder %s18, 0
    %p170 = por %p168, %p169
    %p171 = scmp.ne.s32.totalorder %s159, %s160
    %p172 = scmp.eq.s32.totalorder %s19, 1
    %p173 = por %p171, %p172
    %p175 = scmp.ne.s32.totalorder %s160, %s174
    %p176 = scmp.eq.s32.totalorder %s19, 0
    %p177 = por %p175, %p176
    %s178 = ssub.s32 %s13, %s20
    %p179 = scmp.eq.s32.totalorder %s178, 0
    %s181 = sadd.s32 %s180, 1
    %s182 = scalar_select %p179, %s180, %s181
    %p185 = pneg %p179
    %p186 = scmp.eq.s32.totalorder %s13, 1
    %p187 = por %p185, %p186
    %p188 = scmp.ne.s32.totalorder %s180, %s183
    %p189 = scmp.eq.s32.totalorder %s13, 0
    %p190 = por %p188, %p189
    %p191 = scmp.ne.s32.totalorder %s180, %s183
    %p192 = scmp.eq.s32.totalorder %s18, 1
    %p193 = por %p191, %p192
    %p194 = scmp.ne.s32.totalorder %s183, %s184
    %p195 = scmp.eq.s32.totalorder %s18, 0
    %p196 = por %p194, %p195
    %p197 = scmp.ne.s32.totalorder %s183, %s184
    %p198 = scmp.eq.s32.totalorder %s19, 1
    %p199 = por %p197, %p198
    %p201 = scmp.ne.s32.totalorder %s184, %s200
    %p202 = scmp.eq.s32.totalorder %s19, 0
    %p203 = por %p201, %p202
    %p204 = scmp.le.s32.totalorder 1, %s13
    %p205 = scmp.lt.s32.totalorder %s13, 3
    %p206 = pnand %p204, %p205
    %p207 = pneg %p206
    // Predicated region
    $region9: #{_lambda_.5} parent=5 // pred_check
      _
    $region10: #{_lambda_.5} parent=5 // pred_check_branch
      %209 = sbr.rel (%p206) target = $region12
    $region11: #{_lambda_.5} parent=5 // pred_region
      %s210 = ssub.s32 %s13, 1
      // Predicated region
      $region13: #{_lambda_.5} parent=11 // pred_check
        %p211 = pneg %p86
      $region14: #{_lambda_.5} parent=11 // pred_check_branch
        %213 = sbr.rel (%p211) target = $region16
      $region15: #{_lambda_.5} parent=11 // pred_region
        _
      $region16: #{_lambda_.5} parent=11 // pred_fallthru
        _
      // Predicated region
      $region17: #{_lambda_.5} parent=11 // pred_check
        %p214 = pneg %p107
      $region18: #{_lambda_.5} parent=11 // pred_check_branch
        %216 = sbr.rel (%p214) target = $region20
      $region19: #{_lambda_.5} parent=11 // pred_region
        _
      $region20: #{_lambda_.5} parent=11 // pred_fallthru
        _
      // Predicated region
      $region21: #{_lambda_.5} parent=11 // pred_check
        %p217 = pneg %p128
      $region22: #{_lambda_.5} parent=11 // pred_check_branch
        %219 = sbr.rel (%p217) target = $region24
      $region23: #{_lambda_.5} parent=11 // pred_region
        _
      $region24: #{_lambda_.5} parent=11 // pred_fallthru
        _
      // Predicated region
      $region25: #{_lambda_.5} parent=11 // pred_check
        %p220 = pneg %p149
      $region26: #{_lambda_.5} parent=11 // pred_check_branch
        %222 = sbr.rel (%p220) target = $region28
      $region27: #{_lambda_.5} parent=11 // pred_region
        _
      $region28: #{_lambda_.5} parent=11 // pred_fallthru
        _
      // Predicated region
      $region29: #{_lambda_.5} parent=11 // pred_check
        %p223 = pneg %p170
      $region30: #{_lambda_.5} parent=11 // pred_check_branch
        %225 = sbr.rel (%p223) target = $region32
      $region31: #{_lambda_.5} parent=11 // pred_region
        _
      $region32: #{_lambda_.5} parent=11 // pred_fallthru
        _
    $region12: #{_lambda_.5} parent=5 // pred_fallthru
      _
    %p226 = scmp.lt.s32.totalorder %s13, 2
    // Predicated region
    $region33: #{_lambda_.5} parent=5 // pred_check
      %p227 = pneg %p226
    $region34: #{_lambda_.5} parent=5 // pred_check_branch
      %229 = sbr.rel (%p227) target = $region36
    $region35: #{_lambda_.5} parent=5 // pred_region
      // Predicated region
      $region37: #{_lambda_.5} parent=35 // pred_check
        %p230 = pneg %p33
      $region38: #{_lambda_.5} parent=35 // pred_check_branch
        %232 = sbr.rel (%p230) target = $region40
      $region39: #{_lambda_.5} parent=35 // pred_region
        %p233 = scmp.lt.s32.totalorder %s13, 1
        %s234 = scalar_select %p233, %s13, 1
        %s235 = smul.addr %s234, 2
        %s236 = smul.addr %s235, 4
        %s237 = scalar_lea.vmem %s0, %s236
      $region40: #{_lambda_.5} parent=35 // pred_fallthru
        _
      // Predicated region
      $region41: #{_lambda_.5} parent=35 // pred_check
        %p238 = pneg %p59
      $region42: #{_lambda_.5} parent=35 // pred_check_branch
        %240 = sbr.rel (%p238) target = $region44
      $region43: #{_lambda_.5} parent=35 // pred_region
        %p241 = scmp.lt.s32.totalorder %s13, 1
        %s242 = scalar_select %p241, %s13, 1
        %s243 = smul.addr %s242, 4
        %s244 = scalar_lea.vmem %s1, %s243
      $region44: #{_lambda_.5} parent=35 // pred_fallthru
        _
    $region36: #{_lambda_.5} parent=5 // pred_fallthru
      _
    %p245 = scmp.le.s32.totalorder 1, %s13
    %p246 = scmp.lt.s32.totalorder %s13, 3
    %p247 = pnand %p245, %p246
    %p248 = pneg %p247
    // Predicated region
    $region45: #{_lambda_.5} parent=5 // pred_check
      _
    $region46: #{_lambda_.5} parent=5 // pred_check_branch
      %250 = sbr.rel (%p247) target = $region48
    $region47: #{_lambda_.5} parent=5 // pred_region
      %s251 = ssub.s32 %s13, 1
      %p252 = scmp.lt.s32.totalorder %s18, 1
      %s253 = scalar_select %p252, %s18, 1
      %s254 = smul.addr %s253, 2
      %s255 = smul.addr %s254, 4
      %s256 = scalar_lea.vmem %s0, %s255
      %p257 = pneg %p39
      %p258 = pneg %p36
      %p259 = scmp.lt.s32.totalorder %s18, 1
      %s260 = scalar_select %p259, %s18, 1
      %s261 = smul.addr %s260, 4
      %s262 = scalar_lea.vmem %s1, %s261
      %p263 = pneg %p65
      %p264 = pneg %p62
      %p265 = pneg %p86
      %p266 = pneg %p83
      %p267 = pneg %p107
      %p268 = pneg %p104
      %p269 = pneg %p128
      %p270 = pneg %p125
      %p271 = pneg %p149
      %p272 = pneg %p146
      %p273 = pneg %p170
      %p274 = pneg %p167
      %p275 = pneg %p196
      %p276 = pneg %p193
      %p277 = scmp.lt.s32.totalorder %s18, 1
      %s278 = scalar_select %p277, %s18, 1
      %s279 = smul.addr %s278, 2
      %s280 = scalar_lea.vmem %s7, %s279
      %p281 = scmp.lt.s32.totalorder %s18, 1
      %s282 = scalar_select %p281, %s18, 1
      %s283 = smul.addr %s282, 2
      %s284 = smul.addr %s283, 4
      %s285 = scalar_lea.vmem %s0, %s284
      %p286 = scmp.lt.s32.totalorder %s18, 1
      %s287 = scalar_select %p286, %s18, 1
      %s288 = smul.addr %s287, 4
      %s289 = scalar_lea.vmem %s1, %s288
      %p290 = scmp.lt.s32.totalorder %s18, 1
      %s291 = scalar_select %p290, %s18, 1
      %s292 = smul.addr %s291, 2
      %s293 = scalar_lea.vmem %s7, %s292
      %v295 = vld [vmem:[%s2] sm:$0xf]
      %v296 = vld [vmem:[%s285] sm:$0xf]
      %v297 = vld [vmem:[%s285 + $0x4] sm:$0xf]
      %v298 = vld [vmem:[%s3] sm:$0xf]
      %v299 = vld [vmem:[%s289] sm:$0x7]
      %v300 = vld [vmem:[%s4] sm:$0xff]
      %302 = vset.pattern.permute.xlu0 0
      %303 = vperm.xlu0 %302, %v300
      %v304 = vpop.permute.xlu0 %303
      %vm306 = vcmask 48128
      %v308 = vsel %vm306, %v298, 0
      %vm310 = vcmask 1042432
      %v312 = vsel %vm310, %v299, 0
      %314 = vmatpush.bf16.msra.mxu0 0
      %315 = vmatpush.bf16.msra.mxu0 0
      %316 = vmatpush.bf16.msra.mxu0 0
      %317 = vmatpush.bf16.msra.mxu0 0
      %318 = vmatpush.bf16.msra.mxu0 0
      %319 = vmatpush.bf16.msra.mxu0 0
      %320 = vmatpush.bf16.msra.mxu0 0
      %321 = vmatpush.bf16.msra.mxu0 %v312
      %322 = vmatmul.bf16.gmra.mxu0 %v308
      %v323 = vpop.f32.mrf.mxu0
      %v324 = vadd.f32 %v304, %v323
      %v325 = vpop.f32.mrf.mxu0
      %326 = vdwg.mxu0
      %v329 = vunpack.c.l.b16 %v296
      %v330 = vunpack.c.l.b16 %v297
      %v331 = vpack.c.b16 %v330, %v329
      %vm333 = vcmask 130048
      %v335 = vsel %vm333, %v295, 0
      %337 = vmatpush.bf16.msra.mxu0 0
      %338 = vmatpush.bf16.msra.mxu0 0
      %339 = vmatpush.bf16.msra.mxu0 0
      %340 = vmatpush.bf16.msra.mxu0 0
      %341 = vmatpush.bf16.msra.mxu0 0
      %342 = vmatpush.bf16.msra.mxu0 0
      %343 = vmatpush.bf16.msra.mxu0 0
      %344 = vmatpush.bf16.msra.mxu0 %v331
      %345 = vmatmul.bf16.gmra.mxu0 %v335
      %v346 = vpop.f32.mrf.mxu0
      %v347 = vadd.f32 %v324, %v346
      %v348 = vpop.f32.mrf.mxu0
      %349 = vdwg.mxu0
      %v350 = vmax.f32 %v347, 0.0
      %v351 = vld [vmem:[%s5] sm:$0x3]
      %v352 = vld [vmem:[%s6] sm:$0x3]
      %354 = vset.pattern.permute.xlu0 0
      %355 = vperm.xlu0 %354, %v352
      %v356 = vpop.permute.xlu0 %355
      %vm358 = vcmask 64512
      %v360 = vsel %vm358, %v351, 0
      %362 = vmatpush.msra.mxu0 0.0
      %363 = vmatpush.msra.mxu0 0.0
      %364 = vmatpush.msra.mxu0 0.0
      %365 = vmatpush.msra.mxu0 0.0
      %366 = vmatpush.msra.mxu0 0.0
      %367 = vmatpush.msra.mxu0 0.0
      %368 = vmatpush.msra.mxu0 0.0
      %369 = vmatpush.msra.mxu0 0.0
      %370 = vmatpush.msra.mxu0 0.0
      %371 = vmatpush.msra.mxu0 0.0
      %372 = vmatpush.msra.mxu0 0.0
      %373 = vmatpush.msra.mxu0 0.0
      %374 = vmatpush.msra.mxu0 0.0
      %375 = vmatpush.msra.mxu0 0.0
      %376 = vmatpush.msra.mxu0 0.0
      %377 = vmatpush.msra.mxu0 %v350
      %378 = vmatmul.f32.gmra.mxu0 %v360
      %v379 = vpop.f32.mrf.mxu0
      %v380 = vadd.f32 %v356, %v379
      %381 = vdwg.mxu0
      %v382 = vxor.u32 %v380, 2147483648
      %v383 = vmul.f32 %v382, 1.442695
      %v384 = vpow.pop %v383
      %v385 = vadd.f32 %v384, 1.0
      %v386 = vrcp.pop %v385
      %v387 = vmul.f32 %v385, %v386
      %v388 = vsub.f32 1.0, %v387
      %v389 = vmul.f32 %v386, %v388
      %v390 = vadd.f32 %v386, %v389
      %vm391 = vweird.f32 %v385
      %vm392 = vweird.f32 %v386
      %vm393 = vmor %vm391, %vm392
      %v394 = vsel %vm393, %v386, %v390
      %v395 = vand.u32 2147483647, %v385
      %vm396 = vcmp.eq.f32.partialorder %v395, 8.507059e+37
      %v397 = vand.u32 %v385, 2147483648
      %v398 = vor.u32 1.1754944e-38, %v397
      %v399 = vsel %vm396, %v398, %v394
      %v400 = vmul.f32 1.0, %v399
      %vm401 = vcmask 517120
      %402 = vst.msk [vmem:[%s293] sm:$0x3] %vm401, %v400
      %p403 = scmp.lt.s32.totalorder %s18, 1
      %s404 = scalar_select %p403, %s18, 1
      %s405 = smul.addr %s404, 2
      %s406 = scalar_lea.vmem %s7, %s405
      // Predicated region
      $region49: #{_lambda_.5} parent=47 // pred_check
        %p407 = pneg %p193
      $region50: #{_lambda_.5} parent=47 // pred_check_branch
        %409 = sbr.rel (%p407) target = $region52
      $region51: #{_lambda_.5} parent=47 // pred_region
        _
      $region52: #{_lambda_.5} parent=47 // pred_fallthru
        _
    $region48: #{_lambda_.5} parent=5 // pred_fallthru
      _
    %p410 = scmp.le.s32.totalorder 2, %s13
    // Predicated region
    $region53: #{_lambda_.5} parent=5 // pred_check
      %p411 = pneg %p410
    $region54: #{_lambda_.5} parent=5 // pred_check_branch
      %413 = sbr.rel (%p411) target = $region56
    $region55: #{_lambda_.5} parent=5 // pred_region
      %s414 = ssub.s32 %s13, 2
      // Predicated region
      $region57: #{_lambda_.5} parent=55 // pred_check
        %p415 = pneg %p199
      $region58: #{_lambda_.5} parent=55 // pred_check_branch
        %417 = sbr.rel (%p415) target = $region60
      $region59: #{_lambda_.5} parent=55 // pred_region
        %p418 = scmp.lt.s32.totalorder %s19, 1
        %s419 = scalar_select %p418, %s19, 1
        %s420 = smul.addr %s419, 2
        %s421 = scalar_lea.vmem %s7, %s420
      $region60: #{_lambda_.5} parent=55 // pred_fallthru
        _
    $region56: #{_lambda_.5} parent=5 // pred_fallthru
      _
  $region6: #{_lambda_.5} parent=0 // loop_footer
    %s17 = sadd.s32 1, %s13
  $region7: #{_lambda_.5} parent=0 // loop_footer_branch
    %12 = sbr.rel target = $region3
  $region8: #{_lambda_.5} parent=0 // loop_exit
    _

// kernel: _lambda_.7
$region0: #{_lambda_.7}
  #allocation0 [shape = 'u32[]', space=smem, size = 0x4, offset = 0x4, fixed_abs, tag = 'smem constant byte address 0x4 - core index']
  #allocation1 [shape = 'u32[72,128]{1,0:T(1,128)}', space=vmem, size = 0x9000, scoped, tag = 'internal scratch']
  %s0 = inlined_call_operand.vmem [shape: bf16[2,4,256], index: 0, kind: input, shape index: {}]
  %s1 = inlined_call_operand.vmem [shape: f32[2,2,256], index: 1, kind: input, shape index: {}]
  %s2 = inlined_call_operand.vmem [shape: bf16[8,4], index: 2, kind: input, shape index: {}]
  %s3 = inlined_call_operand.vmem [shape: f32[8,1], index: 3, kind: input, shape index: {}]
  %s4 = inlined_call_operand.vmem [shape: f32[8,2], index: 4, kind: input, shape index: {}]
  %s5 = inlined_call_operand.vmem [shape: bf16[2,8,256], index: 5, kind: output, shape index: {0}]
  %s6 = inlined_call_operand.vmem [shape: f32[2,8,1], index: 6, kind: output, shape index: {1}]
  %s7 = inlined_call_operand.vmem [shape: f32[2,8,1], index: 7, kind: output, shape index: {2}]
  %8 = xla_tuple %s5, %s6, %s7
  %s9 = sld [smem:[#allocation0]]
  $region73: #{_lambda_.7} parent=0
    _
  %s11 = ssub.s32 1, %s9
  %s12 = scalar_select 0, %s11, %s9
  loop: start=0, step=1, limit=4
  $region2: #{_lambda_.7} parent=0 // loop_pre_header
    _
  $region3: #{_lambda_.7} parent=0 // loop_header
    %s14 = sphi 0, %s18
    %p15 = scmp.ge.s32.totalorder %s14, 4
    %s21 = sphi 0, %s33
    %s22 = sphi 0, %s29
    %s23 = sphi 0, %s21
    %s24 = sphi 0, %s22
    %s25 = sphi 0, %s23
    %s26 = sphi 0, %s24
    %s38 = sphi 0, %s40
    %s41 = sphi 0, %s38
    %s42 = sphi 0, %s41
    %s58 = sphi 0, %s42
    %s66 = sphi 0, %s68
    %s69 = sphi 0, %s66
    %s70 = sphi 0, %s69
    %s86 = sphi 0, %s70
    %s90 = sphi 0, %s90
    %s92 = sphi 0, %s90
    %s93 = sphi 0, %s92
    %s107 = sphi 0, %s93
    %s111 = sphi 0, %s111
    %s113 = sphi 0, %s111
    %s114 = sphi 0, %s113
    %s128 = sphi 0, %s114
    %s132 = sphi 0, %s132
    %s134 = sphi 0, %s132
    %s135 = sphi 0, %s134
    %s149 = sphi 0, %s135
    %s157 = sphi 0, %s159
    %s160 = sphi 0, %s157
    %s161 = sphi 0, %s160
    %s177 = sphi 0, %s161
    %s183 = sphi 0, %s185
    %s186 = sphi 0, %s183
    %s187 = sphi 0, %s186
    %s203 = sphi 0, %s187
    %s209 = sphi 0, %s211
    %s212 = sphi 0, %s209
    %s213 = sphi 0, %s212
    %s229 = sphi 0, %s213
  $region4: #{_lambda_.7} parent=0 // loop_header_branch
    %17 = sbr.rel (%p15) target = $region8
  $region5: #{_lambda_.7} parent=0 // loop_body
    %s19 = ssub.s32 %s14, 1
    %s20 = ssub.s32 %s14, 2
    %s27 = sadd.s32 1, %s22
    %p28 = scmp.ge.s32.totalorder %s27, 1
    %s29 = scalar_select %p28, 0, %s27
    %s30 = sadd.s32 1, %s21
    %s31 = scalar_select %p28, %s30, %s21
    %p32 = scmp.ge.s32.totalorder %s31, 2
    %s33 = scalar_select %p32, 0, %s31
    %s34 = ssub.s32 %s21, %s33
    %s35 = ssub.s32 %s22, %s29
    %s36 = sor.u32 %s34, %s35
    %p37 = scmp.eq.s32.totalorder %s36, 0
    %s39 = sadd.s32 %s38, 1
    %s40 = scalar_select %p37, %s38, %s39
    %p43 = pneg %p37
    %p44 = scmp.eq.s32.totalorder %s14, 1
    %p45 = por %p43, %p44
    %p46 = scmp.ne.s32.totalorder %s38, %s41
    %p47 = scmp.eq.s32.totalorder %s14, 0
    %p48 = por %p46, %p47
    %p49 = scmp.ne.s32.totalorder %s38, %s41
    %p50 = scmp.eq.s32.totalorder %s19, 1
    %p51 = por %p49, %p50
    %p52 = scmp.ne.s32.totalorder %s41, %s42
    %p53 = scmp.eq.s32.totalorder %s19, 0
    %p54 = por %p52, %p53
    %p55 = scmp.ne.s32.totalorder %s41, %s42
    %p56 = scmp.eq.s32.totalorder %s20, 1
    %p57 = por %p55, %p56
    %p59 = scmp.ne.s32.totalorder %s42, %s58
    %p60 = scmp.eq.s32.totalorder %s20, 0
    %p61 = por %p59, %p60
    %s62 = ssub.s32 %s21, %s33
    %s63 = ssub.s32 %s22, %s29
    %s64 = sor.u32 %s62, %s63
    %p65 = scmp.eq.s32.totalorder %s64, 0
    %s67 = sadd.s32 %s66, 1
    %s68 = scalar_select %p65, %s66, %s67
    %p71 = pneg %p65
    %p72 = scmp.eq.s32.totalorder %s14, 1
    %p73 = por %p71, %p72
    %p74 = scmp.ne.s32.totalorder %s66, %s69
    %p75 = scmp.eq.s32.totalorder %s14, 0
    %p76 = por %p74, %p75
    %p77 = scmp.ne.s32.totalorder %s66, %s69
    %p78 = scmp.eq.s32.totalorder %s19, 1
    %p79 = por %p77, %p78
    %p80 = scmp.ne.s32.totalorder %s69, %s70
    %p81 = scmp.eq.s32.totalorder %s19, 0
    %p82 = por %p80, %p81
    %p83 = scmp.ne.s32.totalorder %s69, %s70
    %p84 = scmp.eq.s32.totalorder %s20, 1
    %p85 = por %p83, %p84
    %p87 = scmp.ne.s32.totalorder %s70, %s86
    %p88 = scmp.eq.s32.totalorder %s20, 0
    %p89 = por %p87, %p88
    %s91 = sadd.s32 %s90, 1
    %p94 = scmp.eq.s32.totalorder %s14, 1
    %p95 = scmp.ne.s32.totalorder %s90, %s92
    %p96 = scmp.eq.s32.totalorder %s14, 0
    %p97 = por %p95, %p96
    %p98 = scmp.ne.s32.totalorder %s90, %s92
    %p99 = scmp.eq.s32.totalorder %s19, 1
    %p100 = por %p98, %p99
    %p101 = scmp.ne.s32.totalorder %s92, %s93
    %p102 = scmp.eq.s32.totalorder %s19, 0
    %p103 = por %p101, %p102
    %p104 = scmp.ne.s32.totalorder %s92, %s93
    %p105 = scmp.eq.s32.totalorder %s20, 1
    %p106 = por %p104, %p105
    %p108 = scmp.ne.s32.totalorder %s93, %s107
    %p109 = scmp.eq.s32.totalorder %s20, 0
    %p110 = por %p108, %p109
    %s112 = sadd.s32 %s111, 1
    %p115 = scmp.eq.s32.totalorder %s14, 1
    %p116 = scmp.ne.s32.totalorder %s111, %s113
    %p117 = scmp.eq.s32.totalorder %s14, 0
    %p118 = por %p116, %p117
    %p119 = scmp.ne.s32.totalorder %s111, %s113
    %p120 = scmp.eq.s32.totalorder %s19, 1
    %p121 = por %p119, %p120
    %p122 = scmp.ne.s32.totalorder %s113, %s114
    %p123 = scmp.eq.s32.totalorder %s19, 0
    %p124 = por %p122, %p123
    %p125 = scmp.ne.s32.totalorder %s113, %s114
    %p126 = scmp.eq.s32.totalorder %s20, 1
    %p127 = por %p125, %p126
    %p129 = scmp.ne.s32.totalorder %s114, %s128
    %p130 = scmp.eq.s32.totalorder %s20, 0
    %p131 = por %p129, %p130
    %s133 = sadd.s32 %s132, 1
    %p136 = scmp.eq.s32.totalorder %s14, 1
    %p137 = scmp.ne.s32.totalorder %s132, %s134
    %p138 = scmp.eq.s32.totalorder %s14, 0
    %p139 = por %p137, %p138
    %p140 = scmp.ne.s32.totalorder %s132, %s134
    %p141 = scmp.eq.s32.totalorder %s19, 1
    %p142 = por %p140, %p141
    %p143 = scmp.ne.s32.totalorder %s134, %s135
    %p144 = scmp.eq.s32.totalorder %s19, 0
    %p145 = por %p143, %p144
    %p146 = scmp.ne.s32.totalorder %s134, %s135
    %p147 = scmp.eq.s32.totalorder %s20, 1
    %p148 = por %p146, %p147
    %p150 = scmp.ne.s32.totalorder %s135, %s149
    %p151 = scmp.eq.s32.totalorder %s20, 0
    %p152 = por %p150, %p151
    %s153 = ssub.s32 %s21, %s33
    %s154 = ssub.s32 %s22, %s29
    %s155 = sor.u32 %s153, %s154
    %p156 = scmp.eq.s32.totalorder %s155, 0
    %s158 = sadd.s32 %s157, 1
    %s159 = scalar_select %p156, %s157, %s158
    %p162 = pneg %p156
    %p163 = scmp.eq.s32.totalorder %s14, 1
    %p164 = por %p162, %p163
    %p165 = scmp.ne.s32.totalorder %s157, %s160
    %p166 = scmp.eq.s32.totalorder %s14, 0
    %p167 = por %p165, %p166
    %p168 = scmp.ne.s32.totalorder %s157, %s160
    %p169 = scmp.eq.s32.totalorder %s19, 1
    %p170 = por %p168, %p169
    %p171 = scmp.ne.s32.totalorder %s160, %s161
    %p172 = scmp.eq.s32.totalorder %s19, 0
    %p173 = por %p171, %p172
    %p174 = scmp.ne.s32.totalorder %s160, %s161
    %p175 = scmp.eq.s32.totalorder %s20, 1
    %p176 = por %p174, %p175
    %p178 = scmp.ne.s32.totalorder %s161, %s177
    %p179 = scmp.eq.s32.totalorder %s20, 0
    %p180 = por %p178, %p179
    %s181 = ssub.s32 %s21, %s33
    %p182 = scmp.eq.s32.totalorder %s181, 0
    %s184 = sadd.s32 %s183, 1
    %s185 = scalar_select %p182, %s183, %s184
    %p188 = pneg %p182
    %p189 = scmp.eq.s32.totalorder %s14, 1
    %p190 = por %p188, %p189
    %p191 = scmp.ne.s32.totalorder %s183, %s186
    %p192 = scmp.eq.s32.totalorder %s14, 0
    %p193 = por %p191, %p192
    %p194 = scmp.ne.s32.totalorder %s183, %s186
    %p195 = scmp.eq.s32.totalorder %s19, 1
    %p196 = por %p194, %p195
    %p197 = scmp.ne.s32.totalorder %s186, %s187
    %p198 = scmp.eq.s32.totalorder %s19, 0
    %p199 = por %p197, %p198
    %p200 = scmp.ne.s32.totalorder %s186, %s187
    %p201 = scmp.eq.s32.totalorder %s20, 1
    %p202 = por %p200, %p201
    %p204 = scmp.ne.s32.totalorder %s187, %s203
    %p205 = scmp.eq.s32.totalorder %s20, 0
    %p206 = por %p204, %p205
    %s207 = ssub.s32 %s21, %s33
    %p208 = scmp.eq.s32.totalorder %s207, 0
    %s210 = sadd.s32 %s209, 1
    %s211 = scalar_select %p208, %s209, %s210
    %p214 = pneg %p208
    %p215 = scmp.eq.s32.totalorder %s14, 1
    %p216 = por %p214, %p215
    %p217 = scmp.ne.s32.totalorder %s209, %s212
    %p218 = scmp.eq.s32.totalorder %s14, 0
    %p219 = por %p217, %p218
    %p220 = scmp.ne.s32.totalorder %s209, %s212
    %p221 = scmp.eq.s32.totalorder %s19, 1
    %p222 = por %p220, %p221
    %p223 = scmp.ne.s32.totalorder %s212, %s213
    %p224 = scmp.eq.s32.totalorder %s19, 0
    %p225 = por %p223, %p224
    %p226 = scmp.ne.s32.totalorder %s212, %s213
    %p227 = scmp.eq.s32.totalorder %s20, 1
    %p228 = por %p226, %p227
    %p230 = scmp.ne.s32.totalorder %s213, %s229
    %p231 = scmp.eq.s32.totalorder %s20, 0
    %p232 = por %p230, %p231
    %p233 = scmp.le.s32.totalorder 1, %s14
    %p234 = scmp.lt.s32.totalorder %s14, 3
    %p235 = pnand %p233, %p234
    %p236 = pneg %p235
    // Predicated region
    $region9: #{_lambda_.7} parent=5 // pred_check
      _
    $region10: #{_lambda_.7} parent=5 // pred_check_branch
      %238 = sbr.rel (%p235) target = $region12
    $region11: #{_lambda_.7} parent=5 // pred_region
      %s239 = ssub.s32 %s14, 1
      // Predicated region
      $region13: #{_lambda_.7} parent=11 // pred_check
        %p240 = pneg %p103
      $region14: #{_lambda_.7} parent=11 // pred_check_branch
        %242 = sbr.rel (%p240) target = $region16
      $region15: #{_lambda_.7} parent=11 // pred_region
        _
      $region16: #{_lambda_.7} parent=11 // pred_fallthru
        _
      // Predicated region
      $region17: #{_lambda_.7} parent=11 // pred_check
        %p243 = pneg %p124
      $region18: #{_lambda_.7} parent=11 // pred_check_branch
        %245 = sbr.rel (%p243) target = $region20
      $region19: #{_lambda_.7} parent=11 // pred_region
        _
      $region20: #{_lambda_.7} parent=11 // pred_fallthru
        _
      // Predicated region
      $region21: #{_lambda_.7} parent=11 // pred_check
        %p246 = pneg %p145
      $region22: #{_lambda_.7} parent=11 // pred_check_branch
        %248 = sbr.rel (%p246) target = $region24
      $region23: #{_lambda_.7} parent=11 // pred_region
        _
      $region24: #{_lambda_.7} parent=11 // pred_fallthru
        _
    $region12: #{_lambda_.7} parent=5 // pred_fallthru
      _
    %p249 = scmp.lt.s32.totalorder %s14, 2
    // Predicated region
    $region25: #{_lambda_.7} parent=5 // pred_check
      %p250 = pneg %p249
    $region26: #{_lambda_.7} parent=5 // pred_check_branch
      %252 = sbr.rel (%p250) target = $region28
    $region27: #{_lambda_.7} parent=5 // pred_region
      // Predicated region
      $region29: #{_lambda_.7} parent=27 // pred_check
        %p253 = pneg %p48
      $region30: #{_lambda_.7} parent=27 // pred_check_branch
        %255 = sbr.rel (%p253) target = $region32
      $region31: #{_lambda_.7} parent=27 // pred_region
        %s256 = smul.u32 2, %s22
        %p257 = scmp.lt.s32.totalorder %s21, 1
        %s258 = scalar_select %p257, %s21, 1
        %p259 = scmp.lt.s32.totalorder %s256, 1
        %s260 = scalar_select %p259, %s256, 1
        %s261 = smul.addr %s258, 2
        %s262 = sadd.s32 %s260, %s261
        %s263 = smul.addr %s262, 2
        %s264 = scalar_lea.vmem %s0, %s263
        %s265 = smul.u32 2, %s22
      $region32: #{_lambda_.7} parent=27 // pred_fallthru
        _
      // Predicated region
      $region33: #{_lambda_.7} parent=27 // pred_check
        %p266 = pneg %p76
      $region34: #{_lambda_.7} parent=27 // pred_check_branch
        %268 = sbr.rel (%p266) target = $region36
      $region35: #{_lambda_.7} parent=27 // pred_region
        %s269 = smul.u32 2, %s22
        %p270 = scmp.lt.s32.totalorder %s21, 1
        %s271 = scalar_select %p270, %s21, 1
        %p272 = scmp.lt.s32.totalorder %s269, 1
        %s273 = scalar_select %p272, %s269, 1
        %s274 = smul.addr %s271, 2
        %s275 = sadd.s32 %s273, %s274
        %s276 = smul.addr %s275, 2
        %s277 = scalar_lea.vmem %s1, %s276
        %s278 = smul.u32 2, %s22
      $region36: #{_lambda_.7} parent=27 // pred_fallthru
        _
    $region28: #{_lambda_.7} parent=5 // pred_fallthru
      _
    %p279 = scmp.le.s32.totalorder 1, %s14
    %p280 = scmp.lt.s32.totalorder %s14, 3
    %p281 = pnand %p279, %p280
    %p282 = pneg %p281
    // Predicated region
    $region37: #{_lambda_.7} parent=5 // pred_check
      _
    $region38: #{_lambda_.7} parent=5 // pred_check_branch
      %284 = sbr.rel (%p281) target = $region40
    $region39: #{_lambda_.7} parent=5 // pred_region
      %s285 = ssub.s32 %s14, 1
      %s286 = smul.u32 2, %s24
      %p287 = scmp.lt.s32.totalorder %s23, 1
      %s288 = scalar_select %p287, %s23, 1
      %p289 = scmp.lt.s32.totalorder %s286, 1
      %s290 = scalar_select %p289, %s286, 1
      %s291 = smul.addr %s288, 2
      %s292 = sadd.s32 %s290, %s291
      %s293 = smul.addr %s292, 2
      %s294 = scalar_lea.vmem %s0, %s293
      %p295 = pneg %p54
      %p296 = pneg %p51
      %s297 = smul.u32 2, %s24
      %p298 = scmp.lt.s32.totalorder %s23, 1
      %s299 = scalar_select %p298, %s23, 1
      %p300 = scmp.lt.s32.totalorder %s297, 1
      %s301 = scalar_select %p300, %s297, 1
      %s302 = smul.addr %s299, 2
      %s303 = sadd.s32 %s301, %s302
      %s304 = smul.addr %s303, 2
      %s305 = scalar_lea.vmem %s1, %s304
      %p306 = pneg %p82
      %p307 = pneg %p79
      %p308 = pneg %p103
      %p309 = pneg %p100
      %p310 = pneg %p124
      %p311 = pneg %p121
      %p312 = pneg %p145
      %p313 = pneg %p142
      %p314 = pneg %p173
      %p315 = pneg %p170
      %s316 = smul.u32 2, %s24
      %p317 = scmp.lt.s32.totalorder %s23, 1
      %s318 = scalar_select %p317, %s23, 1
      %p319 = scmp.lt.s32.totalorder %s316, 1
      %s320 = scalar_select %p319, %s316, 1
      %s321 = smul.addr %s318, 2
      %s322 = sadd.s32 %s320, %s321
      %s323 = smul.addr %s322, 4
      %s324 = scalar_lea.vmem %s5, %s323
      %p325 = pneg %p199
      %p326 = pneg %p196
      %p327 = scmp.lt.s32.totalorder %s23, 1
      %s328 = scalar_select %p327, %s23, 1
      %s329 = smul.addr %s328, 8
      %s330 = scalar_lea.vmem %s6, %s329
      %p331 = pneg %p225
      %p332 = pneg %p222
      %p333 = scmp.lt.s32.totalorder %s23, 1
      %s334 = scalar_select %p333, %s23, 1
      %s335 = smul.addr %s334, 8
      %s336 = scalar_lea.vmem %s7, %s335
      %s337 = smul.u32 2, %s24
      %p338 = scmp.lt.s32.totalorder %s23, 1
      %s339 = scalar_select %p338, %s23, 1
      %p340 = scmp.lt.s32.totalorder %s337, 1
      %s341 = scalar_select %p340, %s337, 1
      %s342 = smul.addr %s339, 2
      %s343 = sadd.s32 %s341, %s342
      %s344 = smul.addr %s343, 2
      %s345 = scalar_lea.vmem %s0, %s344
      %s346 = smul.u32 2, %s24
      %s347 = smul.u32 2, %s24
      %p348 = scmp.lt.s32.totalorder %s23, 1
      %s349 = scalar_select %p348, %s23, 1
      %p350 = scmp.lt.s32.totalorder %s347, 1
      %s351 = scalar_select %p350, %s347, 1
      %s352 = smul.addr %s349, 2
      %s353 = sadd.s32 %s351, %s352
      %s354 = smul.addr %s353, 2
      %s355 = scalar_lea.vmem %s1, %s354
      %s356 = smul.u32 2, %s24
      %s357 = smul.u32 2, %s24
      %p358 = scmp.lt.s32.totalorder %s23, 1
      %s359 = scalar_select %p358, %s23, 1
      %p360 = scmp.lt.s32.totalorder %s357, 1
      %s361 = scalar_select %p360, %s357, 1
      %s362 = smul.addr %s359, 2
      %s363 = sadd.s32 %s361, %s362
      %s364 = smul.addr %s363, 4
      %s365 = scalar_lea.vmem %s5, %s364
      %s366 = smul.u32 2, %s24
      %p367 = scmp.lt.s32.totalorder %s23, 1
      %s368 = scalar_select %p367, %s23, 1
      %s369 = smul.addr %s368, 8
      %s370 = scalar_lea.vmem %s6, %s369
      %p371 = scmp.lt.s32.totalorder %s23, 1
      %s372 = scalar_select %p371, %s23, 1
      %s373 = smul.addr %s372, 8
      %s374 = scalar_lea.vmem %s7, %s373
      %p376 = scmp.eq.s32.totalorder %s24, 0
      // Predicated region
      $region41: #{_lambda_.7} parent=39 // pred_check
        %p377 = pneg %p376
      $region42: #{_lambda_.7} parent=39 // pred_check_branch
        %379 = sbr.rel (%p377) target = $region44
      $region43: #{_lambda_.7} parent=39 // pred_region
        %vm380 = vcmask 7168
        %381 = vst.msk [vmem:[%s370] sm:$0xff] %vm380, 0.0
        %382 = vst.msk [vmem:[%s374] sm:$0xff] %vm380, 0.0
      $region44: #{_lambda_.7} parent=39 // pred_fallthru
        _
      %v383 = vld [vmem:[%s2] sm:$0xf]
      %v384 = vld [vmem:[%s345] sm:$0xf]
      %386 = vst [vmem:[#allocation1] ss:$4 sm:$0xff] %v384
      %v387 = vld.sshfl [vmem:[#allocation1] sm:$0xff pattern:$0x73625140]
      %v388 = vld.sshfl [vmem:[#allocation1 + $0x8] sm:$0xff pattern:$0x73625140]
      %vm389 = vcmask 31744
      %v391 = vsel %vm389, %v383, 0
      %vm393 = vcmask 1041408
      %v394 = vsel %vm393, %v387, 0
      %v396 = vsel %vm393, %v388, 0
      %398 = vmatpush.bf16.msra.mxu0 0
      %399 = vmatpush.bf16.msra.mxu0 0
      %400 = vmatpush.bf16.msra.mxu0 0
      %401 = vmatpush.bf16.msra.mxu0 0
      %402 = vmatpush.bf16.msra.mxu0 0
      %403 = vmatpush.bf16.msra.mxu0 0
      %404 = vmatpush.bf16.msra.mxu0 0
      %405 = vmatpush.bf16.msra.mxu0 %v394
      %406 = vmatmul.bf16.gmra.mxu0 %v391
      %v407 = vpop.f32.mrf.mxu0
      %v408 = vadd.f32 0.0, %v407
      %v409 = vpop.f32.mrf.mxu0
      %410 = vdwg.mxu0
      %411 = vmatpush.bf16.msra.mxu0 0
      %412 = vmatpush.bf16.msra.mxu0 0
      %413 = vmatpush.bf16.msra.mxu0 0
      %414 = vmatpush.bf16.msra.mxu0 0
      %415 = vmatpush.bf16.msra.mxu0 0
      %416 = vmatpush.bf16.msra.mxu0 0
      %417 = vmatpush.bf16.msra.mxu0 0
      %418 = vmatpush.bf16.msra.mxu0 %v396
      %419 = vmatmul.bf16.gmra.mxu0 %v391
      %v420 = vpop.f32.mrf.mxu0
      %v421 = vadd.f32 0.0, %v420
      %v422 = vpop.f32.mrf.mxu0
      %423 = vdwg.mxu0
      %v424 = vld [vmem:[%s355] sm:$0xf]
      %v425 = vld [vmem:[%s4] sm:$0xff]
      %427 = vst [vmem:[#allocation1] ss:$4 sm:$0xff] %v424
      %v428 = vld.sshfl [vmem:[#allocation1] sm:$0xff pattern:$0x73625140]
      %v429 = vld.sshfl [vmem:[#allocation1 + $0x8] sm:$0xff pattern:$0x73625140]
      %vm430 = vcmask 15360
      %v432 = vsel %vm430, %v425, 0
      %v434 = vsel %vm393, %v428, 0
      %v436 = vsel %vm393, %v429, 0
      %438 = vmatpush.msra.mxu0 0.0
      %439 = vmatpush.msra.mxu0 0.0
      %440 = vmatpush.msra.mxu0 0.0
      %441 = vmatpush.msra.mxu0 0.0
      %442 = vmatpush.msra.mxu0 0.0
      %443 = vmatpush.msra.mxu0 0.0
      %444 = vmatpush.msra.mxu0 0.0
      %445 = vmatpush.msra.mxu0 0.0
      %446 = vmatpush.msra.mxu0 0.0
      %447 = vmatpush.msra.mxu0 0.0
      %448 = vmatpush.msra.mxu0 0.0
      %449 = vmatpush.msra.mxu0 0.0
      %450 = vmatpush.msra.mxu0 0.0
      %451 = vmatpush.msra.mxu0 0.0
      %452 = vmatpush.msra.mxu0 0.0
      %453 = vmatpush.msra.mxu0 %v434
      %454 = vmatmul.f32.gmra.mxu0 %v432
      %v455 = vpop.f32.mrf.mxu0
      %v456 = vadd.f32 0.0, %v455
      %457 = vdwg.mxu0
      %458 = vmatpush.msra.mxu0 0.0
      %459 = vmatpush.msra.mxu0 0.0
      %460 = vmatpush.msra.mxu0 0.0
      %461 = vmatpush.msra.mxu0 0.0
      %462 = vmatpush.msra.mxu0 0.0
      %463 = vmatpush.msra.mxu0 0.0
      %464 = vmatpush.msra.mxu0 0.0
      %465 = vmatpush.msra.mxu0 0.0
      %466 = vmatpush.msra.mxu0 0.0
      %467 = vmatpush.msra.mxu0 0.0
      %468 = vmatpush.msra.mxu0 0.0
      %469 = vmatpush.msra.mxu0 0.0
      %470 = vmatpush.msra.mxu0 0.0
      %471 = vmatpush.msra.mxu0 0.0
      %472 = vmatpush.msra.mxu0 0.0
      %473 = vmatpush.msra.mxu0 %v436
      %474 = vmatmul.f32.gmra.mxu0 %v432
      %v475 = vpop.f32.mrf.mxu0
      %v476 = vadd.f32 0.0, %v475
      %477 = vdwg.mxu0
      %v478 = vmul.f32 %v408, %v456
      %v479 = vmul.f32 %v421, %v476
      %v480 = vld [vmem:[%s3] sm:$0xff]
      %482 = vset.pattern.permute.xlu0 0
      %483 = vperm.xlu0 %482, %v480
      %v484 = vpop.permute.xlu0 %483
      %v486 = vadd.f32 %v478, %v484
      %v487 = vadd.f32 %v479, %v484
      %v488 = vpack.c.bf16 %v487, %v486
      %489 = vst [vmem:[%s365] sm:$0xff] %v488
      %v490 = vld [vmem:[%s370] sm:$0xff]
      %v491 = vadd.f32 %v486, %v487
      %492 = vadd.xlane.f32.xlu0 %v491
      %v493 = vpop.xlane.xlu0 %492
      %v494 = vadd.f32 %v490, %v493
      %vm495 = vcmask 7168
      %496 = vst.msk [vmem:[%s370] sm:$0xff] %vm495, %v494
      %v497 = vld [vmem:[%s374] sm:$0xff]
      %v498 = vmul.f32 %v486, %v486
      %v499 = vmul.f32 %v487, %v487
      %v500 = vadd.f32 %v498, %v499
      %501 = vadd.xlane.f32.xlu0 %v500
      %v502 = vpop.xlane.xlu0 %501
      %v503 = vadd.f32 %v497, %v502
      %504 = vst.msk [vmem:[%s374] sm:$0xff] %vm495, %v503
      %s505 = smul.u32 2, %s24
      %p506 = scmp.lt.s32.totalorder %s23, 1
      %s507 = scalar_select %p506, %s23, 1
      %p508 = scmp.lt.s32.totalorder %s505, 1
      %s509 = scalar_select %p508, %s505, 1
      %s510 = smul.addr %s507, 2
      %s511 = sadd.s32 %s509, %s510
      %s512 = smul.addr %s511, 4
      %s513 = scalar_lea.vmem %s5, %s512
      %p514 = scmp.lt.s32.totalorder %s23, 1
      %s515 = scalar_select %p514, %s23, 1
      %s516 = smul.addr %s515, 8
      %s517 = scalar_lea.vmem %s6, %s516
      %p518 = scmp.lt.s32.totalorder %s23, 1
      %s519 = scalar_select %p518, %s23, 1
      %s520 = smul.addr %s519, 8
      %s521 = scalar_lea.vmem %s7, %s520
      // Predicated region
      $region45: #{_lambda_.7} parent=39 // pred_check
        %p522 = pneg %p170
      $region46: #{_lambda_.7} parent=39 // pred_check_branch
        %524 = sbr.rel (%p522) target = $region48
      $region47: #{_lambda_.7} parent=39 // pred_region
        %s525 = smul.u32 2, %s24
      $region48: #{_lambda_.7} parent=39 // pred_fallthru
        _
      // Predicated region
      $region49: #{_lambda_.7} parent=39 // pred_check
        %p526 = pneg %p196
      $region50: #{_lambda_.7} parent=39 // pred_check_branch
        %528 = sbr.rel (%p526) target = $region52
      $region51: #{_lambda_.7} parent=39 // pred_region
        _
      $region52: #{_lambda_.7} parent=39 // pred_fallthru
        _
      // Predicated region
      $region53: #{_lambda_.7} parent=39 // pred_check
        %p529 = pneg %p222
      $region54: #{_lambda_.7} parent=39 // pred_check_branch
        %531 = sbr.rel (%p529) target = $region56
      $region55: #{_lambda_.7} parent=39 // pred_region
        _
      $region56: #{_lambda_.7} parent=39 // pred_fallthru
        _
    $region40: #{_lambda_.7} parent=5 // pred_fallthru
      _
    %p532 = scmp.le.s32.totalorder 2, %s14
    // Predicated region
    $region57: #{_lambda_.7} parent=5 // pred_check
      %p533 = pneg %p532
    $region58: #{_lambda_.7} parent=5 // pred_check_branch
      %535 = sbr.rel (%p533) target = $region60
    $region59: #{_lambda_.7} parent=5 // pred_region
      %s536 = ssub.s32 %s14, 2
      // Predicated region
      $region61: #{_lambda_.7} parent=59 // pred_check
        %p537 = pneg %p176
      $region62: #{_lambda_.7} parent=59 // pred_check_branch
        %539 = sbr.rel (%p537) target = $region64
      $region63: #{_lambda_.7} parent=59 // pred_region
        %s540 = smul.u32 2, %s26
        %p541 = scmp.lt.s32.totalorder %s25, 1
        %s542 = scalar_select %p541, %s25, 1
        %p543 = scmp.lt.s32.totalorder %s540, 1
        %s544 = scalar_select %p543, %s540, 1
        %s545 = smul.addr %s542, 2
        %s546 = sadd.s32 %s544, %s545
        %s547 = smul.addr %s546, 4
        %s548 = scalar_lea.vmem %s5, %s547
      $region64: #{_lambda_.7} parent=59 // pred_fallthru
        _
      // Predicated region
      $region65: #{_lambda_.7} parent=59 // pred_check
        %p549 = pneg %p202
      $region66: #{_lambda_.7} parent=59 // pred_check_branch
        %551 = sbr.rel (%p549) target = $region68
      $region67: #{_lambda_.7} parent=59 // pred_region
        %p552 = scmp.lt.s32.totalorder %s25, 1
        %s553 = scalar_select %p552, %s25, 1
        %s554 = smul.addr %s553, 8
        %s555 = scalar_lea.vmem %s6, %s554
      $region68: #{_lambda_.7} parent=59 // pred_fallthru
        _
      // Predicated region
      $region69: #{_lambda_.7} parent=59 // pred_check
        %p556 = pneg %p228
      $region70: #{_lambda_.7} parent=59 // pred_check_branch
        %558 = sbr.rel (%p556) target = $region72
      $region71: #{_lambda_.7} parent=59 // pred_region
        %p559 = scmp.lt.s32.totalorder %s25, 1
        %s560 = scalar_select %p559, %s25, 1
        %s561 = smul.addr %s560, 8
        %s562 = scalar_lea.vmem %s7, %s561
      $region72: #{_lambda_.7} parent=59 // pred_fallthru
        _
    $region60: #{_lambda_.7} parent=5 // pred_fallthru
      _
  $region6: #{_lambda_.7} parent=0 // loop_footer
    %s18 = sadd.s32 1, %s14
  $region7: #{_lambda_.7} parent=0 // loop_footer_branch
    %13 = sbr.rel target = $region3
  $region8: #{_lambda_.7} parent=0 // loop_exit
    _

// kernel: _lambda_.8
$region0: #{_lambda_.8}
  #allocation0 [shape = 'u32[]', space=smem, size = 0x4, offset = 0x4, fixed_abs, tag = 'smem constant byte address 0x4 - core index']
  #allocation1 [shape = 'u32[72,128]{1,0:T(1,128)}', space=vmem, size = 0x9000, scoped, tag = 'internal scratch']
  %s0 = inlined_call_operand.vmem [shape: bf16[2,8,256], index: 0, kind: input, shape index: {}]
  %s1 = inlined_call_operand.vmem [shape: f32[8,1], index: 1, kind: input, shape index: {}]
  %s2 = inlined_call_operand.vmem [shape: f32[8,1], index: 2, kind: input, shape index: {}]
  %s3 = inlined_call_operand.vmem [shape: bf16[4,8], index: 3, kind: input, shape index: {}]
  %s4 = inlined_call_operand.vmem [shape: f32[4,1], index: 4, kind: input, shape index: {}]
  %s5 = inlined_call_operand.vmem [shape: f32[2,4,256], index: 5, kind: output, shape index: {0}]
  %s6 = inlined_call_operand.vmem [shape: f32[2,4,1], index: 6, kind: output, shape index: {1}]
  %s7 = inlined_call_operand.vmem [shape: f32[2,4,1], index: 7, kind: output, shape index: {2}]
  %8 = xla_tuple %s5, %s6, %s7
  %s9 = sld [smem:[#allocation0]]
  $region73: #{_lambda_.8} parent=0
    _
  %s11 = ssub.s32 1, %s9
  %s12 = scalar_select 0, %s11, %s9
  loop: start=0, step=1, limit=4
  $region2: #{_lambda_.8} parent=0 // loop_pre_header
    _
  $region3: #{_lambda_.8} parent=0 // loop_header
    %s14 = sphi 0, %s18
    %p15 = scmp.ge.s32.totalorder %s14, 4
    %s21 = sphi 0, %s33
    %s22 = sphi 0, %s29
    %s23 = sphi 0, %s21
    %s24 = sphi 0, %s22
    %s25 = sphi 0, %s23
    %s26 = sphi 0, %s24
    %s38 = sphi 0, %s40
    %s41 = sphi 0, %s38
    %s42 = sphi 0, %s41
    %s58 = sphi 0, %s42
    %s62 = sphi 0, %s62
    %s64 = sphi 0, %s62
    %s65 = sphi 0, %s64
    %s79 = sphi 0, %s65
    %s83 = sphi 0, %s83
    %s85 = sphi 0, %s83
    %s86 = sphi 0, %s85
    %s100 = sphi 0, %s86
    %s104 = sphi 0, %s104
    %s106 = sphi 0, %s104
    %s107 = sphi 0, %s106
    %s121 = sphi 0, %s107
    %s125 = sphi 0, %s125
    %s127 = sphi 0, %s125
    %s128 = sphi 0, %s127
    %s142 = sphi 0, %s128
    %s150 = sphi 0, %s152
    %s153 = sphi 0, %s150
    %s154 = sphi 0, %s153
    %s170 = sphi 0, %s154
    %s176 = sphi 0, %s178
    %s179 = sphi 0, %s176
    %s180 = sphi 0, %s179
    %s196 = sphi 0, %s180
    %s202 = sphi 0, %s204
    %s205 = sphi 0, %s202
    %s206 = sphi 0, %s205
    %s222 = sphi 0, %s206
  $region4: #{_lambda_.8} parent=0 // loop_header_branch
    %17 = sbr.rel (%p15) target = $region8
  $region5: #{_lambda_.8} parent=0 // loop_body
    %s19 = ssub.s32 %s14, 1
    %s20 = ssub.s32 %s14, 2
    %s27 = sadd.s32 1, %s22
    %p28 = scmp.ge.s32.totalorder %s27, 1
    %s29 = scalar_select %p28, 0, %s27
    %s30 = sadd.s32 1, %s21
    %s31 = scalar_select %p28, %s30, %s21
    %p32 = scmp.ge.s32.totalorder %s31, 2
    %s33 = scalar_select %p32, 0, %s31
    %s34 = ssub.s32 %s21, %s33
    %s35 = ssub.s32 %s22, %s29
    %s36 = sor.u32 %s34, %s35
    %p37 = scmp.eq.s32.totalorder %s36, 0
    %s39 = sadd.s32 %s38, 1
    %s40 = scalar_select %p37, %s38, %s39
    %p43 = pneg %p37
    %p44 = scmp.eq.s32.totalorder %s14, 1
    %p45 = por %p43, %p44
    %p46 = scmp.ne.s32.totalorder %s38, %s41
    %p47 = scmp.eq.s32.totalorder %s14, 0
    %p48 = por %p46, %p47
    %p49 = scmp.ne.s32.totalorder %s38, %s41
    %p50 = scmp.eq.s32.totalorder %s19, 1
    %p51 = por %p49, %p50
    %p52 = scmp.ne.s32.totalorder %s41, %s42
    %p53 = scmp.eq.s32.totalorder %s19, 0
    %p54 = por %p52, %p53
    %p55 = scmp.ne.s32.totalorder %s41, %s42
    %p56 = scmp.eq.s32.totalorder %s20, 1
    %p57 = por %p55, %p56
    %p59 = scmp.ne.s32.totalorder %s42, %s58
    %p60 = scmp.eq.s32.totalorder %s20, 0
    %p61 = por %p59, %p60
    %s63 = sadd.s32 %s62, 1
    %p66 = scmp.eq.s32.totalorder %s14, 1
    %p67 = scmp.ne.s32.totalorder %s62, %s64
    %p68 = scmp.eq.s32.totalorder %s14, 0
    %p69 = por %p67, %p68
    %p70 = scmp.ne.s32.totalorder %s62, %s64
    %p71 = scmp.eq.s32.totalorder %s19, 1
    %p72 = por %p70, %p71
    %p73 = scmp.ne.s32.totalorder %s64, %s65
    %p74 = scmp.eq.s32.totalorder %s19, 0
    %p75 = por %p73, %p74
    %p76 = scmp.ne.s32.totalorder %s64, %s65
    %p77 = scmp.eq.s32.totalorder %s20, 1
    %p78 = por %p76, %p77
    %p80 = scmp.ne.s32.totalorder %s65, %s79
    %p81 = scmp.eq.s32.totalorder %s20, 0
    %p82 = por %p80, %p81
    %s84 = sadd.s32 %s83, 1
    %p87 = scmp.eq.s32.totalorder %s14, 1
    %p88 = scmp.ne.s32.totalorder %s83, %s85
    %p89 = scmp.eq.s32.totalorder %s14, 0
    %p90 = por %p88, %p89
    %p91 = scmp.ne.s32.totalorder %s83, %s85
    %p92 = scmp.eq.s32.totalorder %s19, 1
    %p93 = por %p91, %p92
    %p94 = scmp.ne.s32.totalorder %s85, %s86
    %p95 = scmp.eq.s32.totalorder %s19, 0
    %p96 = por %p94, %p95
    %p97 = scmp.ne.s32.totalorder %s85, %s86
    %p98 = scmp.eq.s32.totalorder %s20, 1
    %p99 = por %p97, %p98
    %p101 = scmp.ne.s32.totalorder %s86, %s100
    %p102 = scmp.eq.s32.totalorder %s20, 0
    %p103 = por %p101, %p102
    %s105 = sadd.s32 %s104, 1
    %p108 = scmp.eq.s32.totalorder %s14, 1
    %p109 = scmp.ne.s32.totalorder %s104, %s106
    %p110 = scmp.eq.s32.totalorder %s14, 0
    %p111 = por %p109, %p110
    %p112 = scmp.ne.s32.totalorder %s104, %s106
    %p113 = scmp.eq.s32.totalorder %s19, 1
    %p114 = por %p112, %p113
    %p115 = scmp.ne.s32.totalorder %s106, %s107
    %p116 = scmp.eq.s32.totalorder %s19, 0
    %p117 = por %p115, %p116
    %p118 = scmp.ne.s32.totalorder %s106, %s107
    %p119 = scmp.eq.s32.totalorder %s20, 1
    %p120 = por %p118, %p119
    %p122 = scmp.ne.s32.totalorder %s107, %s121
    %p123 = scmp.eq.s32.totalorder %s20, 0
    %p124 = por %p122, %p123
    %s126 = sadd.s32 %s125, 1
    %p129 = scmp.eq.s32.totalorder %s14, 1
    %p130 = scmp.ne.s32.totalorder %s125, %s127
    %p131 = scmp.eq.s32.totalorder %s14, 0
    %p132 = por %p130, %p131
    %p133 = scmp.ne.s32.totalorder %s125, %s127
    %p134 = scmp.eq.s32.totalorder %s19, 1
    %p135 = por %p133, %p134
    %p136 = scmp.ne.s32.totalorder %s127, %s128
    %p137 = scmp.eq.s32.totalorder %s19, 0
    %p138 = por %p136, %p137
    %p139 = scmp.ne.s32.totalorder %s127, %s128
    %p140 = scmp.eq.s32.totalorder %s20, 1
    %p141 = por %p139, %p140
    %p143 = scmp.ne.s32.totalorder %s128, %s142
    %p144 = scmp.eq.s32.totalorder %s20, 0
    %p145 = por %p143, %p144
    %s146 = ssub.s32 %s21, %s33
    %s147 = ssub.s32 %s22, %s29
    %s148 = sor.u32 %s146, %s147
    %p149 = scmp.eq.s32.totalorder %s148, 0
    %s151 = sadd.s32 %s150, 1
    %s152 = scalar_select %p149, %s150, %s151
    %p155 = pneg %p149
    %p156 = scmp.eq.s32.totalorder %s14, 1
    %p157 = por %p155, %p156
    %p158 = scmp.ne.s32.totalorder %s150, %s153
    %p159 = scmp.eq.s32.totalorder %s14, 0
    %p160 = por %p158, %p159
    %p161 = scmp.ne.s32.totalorder %s150, %s153
    %p162 = scmp.eq.s32.totalorder %s19, 1
    %p163 = por %p161, %p162
    %p164 = scmp.ne.s32.totalorder %s153, %s154
    %p165 = scmp.eq.s32.totalorder %s19, 0
    %p166 = por %p164, %p165
    %p167 = scmp.ne.s32.totalorder %s153, %s154
    %p168 = scmp.eq.s32.totalorder %s20, 1
    %p169 = por %p167, %p168
    %p171 = scmp.ne.s32.totalorder %s154, %s170
    %p172 = scmp.eq.s32.totalorder %s20, 0
    %p173 = por %p171, %p172
    %s174 = ssub.s32 %s21, %s33
    %p175 = scmp.eq.s32.totalorder %s174, 0
    %s177 = sadd.s32 %s176, 1
    %s178 = scalar_select %p175, %s176, %s177
    %p181 = pneg %p175
    %p182 = scmp.eq.s32.totalorder %s14, 1
    %p183 = por %p181, %p182
    %p184 = scmp.ne.s32.totalorder %s176, %s179
    %p185 = scmp.eq.s32.totalorder %s14, 0
    %p186 = por %p184, %p185
    %p187 = scmp.ne.s32.totalorder %s176, %s179
    %p188 = scmp.eq.s32.totalorder %s19, 1
    %p189 = por %p187, %p188
    %p190 = scmp.ne.s32.totalorder %s179, %s180
    %p191 = scmp.eq.s32.totalorder %s19, 0
    %p192 = por %p190, %p191
    %p193 = scmp.ne.s32.totalorder %s179, %s180
    %p194 = scmp.eq.s32.totalorder %s20, 1
    %p195 = por %p193, %p194
    %p197 = scmp.ne.s32.totalorder %s180, %s196
    %p198 = scmp.eq.s32.totalorder %s20, 0
    %p199 = por %p197, %p198
    %s200 = ssub.s32 %s21, %s33
    %p201 = scmp.eq.s32.totalorder %s200, 0
    %s203 = sadd.s32 %s202, 1
    %s204 = scalar_select %p201, %s202, %s203
    %p207 = pneg %p201
    %p208 = scmp.eq.s32.totalorder %s14, 1
    %p209 = por %p207, %p208
    %p210 = scmp.ne.s32.totalorder %s202, %s205
    %p211 = scmp.eq.s32.totalorder %s14, 0
    %p212 = por %p210, %p211
    %p213 = scmp.ne.s32.totalorder %s202, %s205
    %p214 = scmp.eq.s32.totalorder %s19, 1
    %p215 = por %p213, %p214
    %p216 = scmp.ne.s32.totalorder %s205, %s206
    %p217 = scmp.eq.s32.totalorder %s19, 0
    %p218 = por %p216, %p217
    %p219 = scmp.ne.s32.totalorder %s205, %s206
    %p220 = scmp.eq.s32.totalorder %s20, 1
    %p221 = por %p219, %p220
    %p223 = scmp.ne.s32.totalorder %s206, %s222
    %p224 = scmp.eq.s32.totalorder %s20, 0
    %p225 = por %p223, %p224
    %p226 = scmp.le.s32.totalorder 1, %s14
    %p227 = scmp.lt.s32.totalorder %s14, 3
    %p228 = pnand %p226, %p227
    %p229 = pneg %p228
    // Predicated region
    $region9: #{_lambda_.8} parent=5 // pred_check
      _
    $region10: #{_lambda_.8} parent=5 // pred_check_branch
      %231 = sbr.rel (%p228) target = $region12
    $region11: #{_lambda_.8} parent=5 // pred_region
      %s232 = ssub.s32 %s14, 1
      // Predicated region
      $region13: #{_lambda_.8} parent=11 // pred_check
        %p233 = pneg %p75
      $region14: #{_lambda_.8} parent=11 // pred_check_branch
        %235 = sbr.rel (%p233) target = $region16
      $region15: #{_lambda_.8} parent=11 // pred_region
        _
      $region16: #{_lambda_.8} parent=11 // pred_fallthru
        _
      // Predicated region
      $region17: #{_lambda_.8} parent=11 // pred_check
        %p236 = pneg %p96
      $region18: #{_lambda_.8} parent=11 // pred_check_branch
        %238 = sbr.rel (%p236) target = $region20
      $region19: #{_lambda_.8} parent=11 // pred_region
        _
      $region20: #{_lambda_.8} parent=11 // pred_fallthru
        _
      // Predicated region
      $region21: #{_lambda_.8} parent=11 // pred_check
        %p239 = pneg %p117
      $region22: #{_lambda_.8} parent=11 // pred_check_branch
        %241 = sbr.rel (%p239) target = $region24
      $region23: #{_lambda_.8} parent=11 // pred_region
        _
      $region24: #{_lambda_.8} parent=11 // pred_fallthru
        _
      // Predicated region
      $region25: #{_lambda_.8} parent=11 // pred_check
        %p242 = pneg %p138
      $region26: #{_lambda_.8} parent=11 // pred_check_branch
        %244 = sbr.rel (%p242) target = $region28
      $region27: #{_lambda_.8} parent=11 // pred_region
        _
      $region28: #{_lambda_.8} parent=11 // pred_fallthru
        _
    $region12: #{_lambda_.8} parent=5 // pred_fallthru
      _
    %p245 = scmp.lt.s32.totalorder %s14, 2
    // Predicated region
    $region29: #{_lambda_.8} parent=5 // pred_check
      %p246 = pneg %p245
    $region30: #{_lambda_.8} parent=5 // pred_check_branch
      %248 = sbr.rel (%p246) target = $region32
    $region31: #{_lambda_.8} parent=5 // pred_region
      // Predicated region
      $region33: #{_lambda_.8} parent=31 // pred_check
        %p249 = pneg %p48
      $region34: #{_lambda_.8} parent=31 // pred_check_branch
        %251 = sbr.rel (%p249) target = $region36
      $region35: #{_lambda_.8} parent=31 // pred_region
        %s252 = smul.u32 2, %s22
        %p253 = scmp.lt.s32.totalorder %s21, 1
        %s254 = scalar_select %p253, %s21, 1
        %p255 = scmp.lt.s32.totalorder %s252, 1
        %s256 = scalar_select %p255, %s252, 1
        %s257 = smul.addr %s254, 2
        %s258 = sadd.s32 %s256, %s257
        %s259 = smul.addr %s258, 4
        %s260 = scalar_lea.vmem %s0, %s259
        %s261 = smul.u32 2, %s22
      $region36: #{_lambda_.8} parent=31 // pred_fallthru
        _
    $region32: #{_lambda_.8} parent=5 // pred_fallthru
      _
    %p262 = scmp.le.s32.totalorder 1, %s14
    %p263 = scmp.lt.s32.totalorder %s14, 3
    %p264 = pnand %p262, %p263
    %p265 = pneg %p264
    // Predicated region
    $region37: #{_lambda_.8} parent=5 // pred_check
      _
    $region38: #{_lambda_.8} parent=5 // pred_check_branch
      %267 = sbr.rel (%p264) target = $region40
    $region39: #{_lambda_.8} parent=5 // pred_region
      %s268 = ssub.s32 %s14, 1
      %s269 = smul.u32 2, %s24
      %p270 = scmp.lt.s32.totalorder %s23, 1
      %s271 = scalar_select %p270, %s23, 1
      %p272 = scmp.lt.s32.totalorder %s269, 1
      %s273 = scalar_select %p272, %s269, 1
      %s274 = smul.addr %s271, 2
      %s275 = sadd.s32 %s273, %s274
      %s276 = smul.addr %s275, 4
      %s277 = scalar_lea.vmem %s0, %s276
      %p278 = pneg %p54
      %p279 = pneg %p51
      %p280 = pneg %p75
      %p281 = pneg %p72
      %p282 = pneg %p96
      %p283 = pneg %p93
      %p284 = pneg %p117
      %p285 = pneg %p114
      %p286 = pneg %p138
      %p287 = pneg %p135
      %p288 = pneg %p166
      %p289 = pneg %p163
      %s290 = smul.u32 2, %s24
      %p291 = scmp.lt.s32.totalorder %s23, 1
      %s292 = scalar_select %p291, %s23, 1
      %p293 = scmp.lt.s32.totalorder %s290, 1
      %s294 = scalar_select %p293, %s290, 1
      %s295 = smul.addr %s292, 2
      %s296 = sadd.s32 %s294, %s295
      %s297 = smul.addr %s296, 4
      %s298 = scalar_lea.vmem %s5, %s297
      %p299 = pneg %p192
      %p300 = pneg %p189
      %p301 = scmp.lt.s32.totalorder %s23, 1
      %s302 = scalar_select %p301, %s23, 1
      %s303 = smul.addr %s302, 4
      %s304 = scalar_lea.vmem %s6, %s303
      %p305 = pneg %p218
      %p306 = pneg %p215
      %p307 = scmp.lt.s32.totalorder %s23, 1
      %s308 = scalar_select %p307, %s23, 1
      %s309 = smul.addr %s308, 4
      %s310 = scalar_lea.vmem %s7, %s309
      %s311 = smul.u32 2, %s24
      %p312 = scmp.lt.s32.totalorder %s23, 1
      %s313 = scalar_select %p312, %s23, 1
      %p314 = scmp.lt.s32.totalorder %s311, 1
      %s315 = scalar_select %p314, %s311, 1
      %s316 = smul.addr %s313, 2
      %s317 = sadd.s32 %s315, %s316
      %s318 = smul.addr %s317, 4
      %s319 = scalar_lea.vmem %s0, %s318
      %s320 = smul.u32 2, %s24
      %s321 = smul.u32 2, %s24
      %p322 = scmp.lt.s32.totalorder %s23, 1
      %s323 = scalar_select %p322, %s23, 1
      %p324 = scmp.lt.s32.totalorder %s321, 1
      %s325 = scalar_select %p324, %s321, 1
      %s326 = smul.addr %s323, 2
      %s327 = sadd.s32 %s325, %s326
      %s328 = smul.addr %s327, 4
      %s329 = scalar_lea.vmem %s5, %s328
      %s330 = smul.u32 2, %s24
      %p331 = scmp.lt.s32.totalorder %s23, 1
      %s332 = scalar_select %p331, %s23, 1
      %s333 = smul.addr %s332, 4
      %s334 = scalar_lea.vmem %s6, %s333
      %p335 = scmp.lt.s32.totalorder %s23, 1
      %s336 = scalar_select %p335, %s23, 1
      %s337 = smul.addr %s336, 4
      %s338 = scalar_lea.vmem %s7, %s337
      %p340 = scmp.eq.s32.totalorder %s24, 0
      // Predicated region
      $region41: #{_lambda_.8} parent=39 // pred_check
        %p341 = pneg %p340
      $region42: #{_lambda_.8} parent=39 // pred_check_branch
        %343 = sbr.rel (%p341) target = $region44
      $region43: #{_lambda_.8} parent=39 // pred_region
        %vm344 = vcmask 3072
        %345 = vst.msk [vmem:[%s334] sm:$0xf] %vm344, 0.0
        %346 = vst.msk [vmem:[%s338] sm:$0xf] %vm344, 0.0
      $region44: #{_lambda_.8} parent=39 // pred_fallthru
        _
      %v347 = vld [vmem:[%s319] sm:$0xff]
      %v348 = vunpack.c.l.bf16 %v347
      %v349 = vunpack.c.h.bf16 %v347
      %v350 = vld [vmem:[%s1] sm:$0xff]
      %352 = vset.pattern.permute.xlu0 0
      %353 = vperm.xlu0 %352, %v350
      %v354 = vpop.permute.xlu0 %353
      %v356 = vmul.f32 %v348, %v354
      %v357 = vmul.f32 %v349, %v354
      %v358 = vld [vmem:[%s2] sm:$0xff]
      %360 = vset.pattern.permute.xlu0 0
      %361 = vperm.xlu0 %360, %v358
      %v362 = vpop.permute.xlu0 %361
      %v364 = vadd.f32 %v356, %v362
      %v365 = vadd.f32 %v357, %v362
      %v366 = vld [vmem:[%s3] sm:$0x3]
      %v367 = vpack.c.bf16 %v364, %v364
      %v368 = vpack.c.bf16 %v365, %v365
      %v369 = vld [vmem:[%s4] sm:$0xf]
      %371 = vset.pattern.permute.xlu0 0
      %372 = vperm.xlu0 %371, %v369
      %v373 = vpop.permute.xlu0 %372
      %vm375 = vcmask 64512
      %v377 = vsel %vm375, %v366, 0
      %vm379 = vcmask 1043456
      %v381 = vsel %vm379, %v367, 0
      %v384 = vsel %vm379, %v368, 0
      %386 = vmatpush.bf16.msra.mxu0 0
      %387 = vmatpush.bf16.msra.mxu0 0
      %388 = vmatpush.bf16.msra.mxu0 0
      %389 = vmatpush.bf16.msra.mxu0 0
      %390 = vmatpush.bf16.msra.mxu0 0
      %391 = vmatpush.bf16.msra.mxu0 0
      %392 = vmatpush.bf16.msra.mxu0 0
      %393 = vmatpush.bf16.msra.mxu0 %v381
      %394 = vmatmul.bf16.gmra.mxu0 %v377
      %v395 = vpop.f32.mrf.mxu0
      %v396 = vadd.f32 %v373, %v395
      %v397 = vpop.f32.mrf.mxu0
      %398 = vdwg.mxu0
      %399 = vmatpush.bf16.msra.mxu0 0
      %400 = vmatpush.bf16.msra.mxu0 0
      %401 = vmatpush.bf16.msra.mxu0 0
      %402 = vmatpush.bf16.msra.mxu0 0
      %403 = vmatpush.bf16.msra.mxu0 0
      %404 = vmatpush.bf16.msra.mxu0 0
      %405 = vmatpush.bf16.msra.mxu0 0
      %406 = vmatpush.bf16.msra.mxu0 %v384
      %407 = vmatmul.bf16.gmra.mxu0 %v377
      %v408 = vpop.f32.mrf.mxu0
      %v409 = vadd.f32 %v373, %v408
      %v410 = vpop.f32.mrf.mxu0
      %411 = vdwg.mxu0
      %v414 = vrot.slane %v409, 4
      %v415 = vsel %vm379, %v396, %v414
      %417 = vst [vmem:[%s329] sm:$0xff] %v415
      %v418 = vld [vmem:[%s334] sm:$0xf]
      %v419 = vsel %vm379, %v396, 0.0
      %v420 = vsel %vm379, %v409, 0.0
      %v421 = vadd.f32 %v419, %v420
      %422 = vadd.xlane.f32.xlu0 %v421
      %v423 = vpop.xlane.xlu0 %422
      %v424 = vadd.f32 %v418, %v423
      %vm425 = vcmask 3072
      %426 = vst.msk [vmem:[%s334] sm:$0xf] %vm425, %v424
      %v427 = vld [vmem:[%s338] sm:$0xf]
      %v428 = vmul.f32 %v396, %v396
      %v429 = vmul.f32 %v409, %v409
      %v430 = vsel %vm379, %v428, 0.0
      %v431 = vsel %vm379, %v429, 0.0
      %v432 = vadd.f32 %v430, %v431
      %433 = vadd.xlane.f32.xlu0 %v432
      %v434 = vpop.xlane.xlu0 %433
      %v435 = vadd.f32 %v427, %v434
      %436 = vst.msk [vmem:[%s338] sm:$0xf] %vm425, %v435
      %s437 = smul.u32 2, %s24
      %p438 = scmp.lt.s32.totalorder %s23, 1
      %s439 = scalar_select %p438, %s23, 1
      %p440 = scmp.lt.s32.totalorder %s437, 1
      %s441 = scalar_select %p440, %s437, 1
      %s442 = smul.addr %s439, 2
      %s443 = sadd.s32 %s441, %s442
      %s444 = smul.addr %s443, 4
      %s445 = scalar_lea.vmem %s5, %s444
      %p446 = scmp.lt.s32.totalorder %s23, 1
      %s447 = scalar_select %p446, %s23, 1
      %s448 = smul.addr %s447, 4
      %s449 = scalar_lea.vmem %s6, %s448
      %p450 = scmp.lt.s32.totalorder %s23, 1
      %s451 = scalar_select %p450, %s23, 1
      %s452 = smul.addr %s451, 4
      %s453 = scalar_lea.vmem %s7, %s452
      // Predicated region
      $region45: #{_lambda_.8} parent=39 // pred_check
        %p454 = pneg %p163
      $region46: #{_lambda_.8} parent=39 // pred_check_branch
        %456 = sbr.rel (%p454) target = $region48
      $region47: #{_lambda_.8} parent=39 // pred_region
        %s457 = smul.u32 2, %s24
      $region48: #{_lambda_.8} parent=39 // pred_fallthru
        _
      // Predicated region
      $region49: #{_lambda_.8} parent=39 // pred_check
        %p458 = pneg %p189
      $region50: #{_lambda_.8} parent=39 // pred_check_branch
        %460 = sbr.rel (%p458) target = $region52
      $region51: #{_lambda_.8} parent=39 // pred_region
        _
      $region52: #{_lambda_.8} parent=39 // pred_fallthru
        _
      // Predicated region
      $region53: #{_lambda_.8} parent=39 // pred_check
        %p461 = pneg %p215
      $region54: #{_lambda_.8} parent=39 // pred_check_branch
        %463 = sbr.rel (%p461) target = $region56
      $region55: #{_lambda_.8} parent=39 // pred_region
        _
      $region56: #{_lambda_.8} parent=39 // pred_fallthru
        _
    $region40: #{_lambda_.8} parent=5 // pred_fallthru
      _
    %p464 = scmp.le.s32.totalorder 2, %s14
    // Predicated region
    $region57: #{_lambda_.8} parent=5 // pred_check
      %p465 = pneg %p464
    $region58: #{_lambda_.8} parent=5 // pred_check_branch
      %467 = sbr.rel (%p465) target = $region60
    $region59: #{_lambda_.8} parent=5 // pred_region
      %s468 = ssub.s32 %s14, 2
      // Predicated region
      $region61: #{_lambda_.8} parent=59 // pred_check
        %p469 = pneg %p169
      $region62: #{_lambda_.8} parent=59 // pred_check_branch
        %471 = sbr.rel (%p469) target = $region64
      $region63: #{_lambda_.8} parent=59 // pred_region
        %s472 = smul.u32 2, %s26
        %p473 = scmp.lt.s32.totalorder %s25, 1
        %s474 = scalar_select %p473, %s25, 1
        %p475 = scmp.lt.s32.totalorder %s472, 1
        %s476 = scalar_select %p475, %s472, 1
        %s477 = smul.addr %s474, 2
        %s478 = sadd.s32 %s476, %s477
        %s479 = smul.addr %s478, 4
        %s480 = scalar_lea.vmem %s5, %s479
      $region64: #{_lambda_.8} parent=59 // pred_fallthru
        _
      // Predicated region
      $region65: #{_lambda_.8} parent=59 // pred_check
        %p481 = pneg %p195
      $region66: #{_lambda_.8} parent=59 // pred_check_branch
        %483 = sbr.rel (%p481) target = $region68
      $region67: #{_lambda_.8} parent=59 // pred_region
        %p484 = scmp.lt.s32.totalorder %s25, 1
        %s485 = scalar_select %p484, %s25, 1
        %s486 = smul.addr %s485, 4
        %s487 = scalar_lea.vmem %s6, %s486
      $region68: #{_lambda_.8} parent=59 // pred_fallthru
        _
      // Predicated region
      $region69: #{_lambda_.8} parent=59 // pred_check
        %p488 = pneg %p221
      $region70: #{_lambda_.8} parent=59 // pred_check_branch
        %490 = sbr.rel (%p488) target = $region72
      $region71: #{_lambda_.8} parent=59 // pred_region
        %p491 = scmp.lt.s32.totalorder %s25, 1
        %s492 = scalar_select %p491, %s25, 1
        %s493 = smul.addr %s492, 4
        %s494 = scalar_lea.vmem %s7, %s493
      $region72: #{_lambda_.8} parent=59 // pred_fallthru
        _
    $region60: #{_lambda_.8} parent=5 // pred_fallthru
      _
  $region6: #{_lambda_.8} parent=0 // loop_footer
    %s18 = sadd.s32 1, %s14
  $region7: #{_lambda_.8} parent=0 // loop_footer_branch
    %13 = sbr.rel target = $region3
  $region8: #{_lambda_.8} parent=0 // loop_exit
    _

// kernel: _lambda_.9
$region0: #{_lambda_.9}
  #allocation0 [shape = 'u32[]', space=smem, size = 0x4, offset = 0x4, fixed_abs, tag = 'smem constant byte address 0x4 - core index']
  #allocation1 [shape = 'u32[72,128]{1,0:T(1,128)}', space=vmem, size = 0x9000, scoped, tag = 'internal scratch']
  %s0 = inlined_call_operand.vmem [shape: f32[2,4,256], index: 0, kind: input, shape index: {}]
  %s1 = inlined_call_operand.vmem [shape: f32[4,1], index: 1, kind: input, shape index: {}]
  %s2 = inlined_call_operand.vmem [shape: f32[4,1], index: 2, kind: input, shape index: {}]
  %s3 = inlined_call_operand.vmem [shape: f32[2,4,256], index: 3, kind: output, shape index: {}]
  %s4 = sld [smem:[#allocation0]]
  $region45: #{_lambda_.9} parent=0
    _
  %s6 = ssub.s32 1, %s4
  %s7 = scalar_select 0, %s6, %s4
  loop: start=0, step=1, limit=4
  $region2: #{_lambda_.9} parent=0 // loop_pre_header
    _
  $region3: #{_lambda_.9} parent=0 // loop_header
    %s9 = sphi 0, %s13
    %p10 = scmp.ge.s32.totalorder %s9, 4
    %s16 = sphi 0, %s28
    %s17 = sphi 0, %s24
    %s18 = sphi 0, %s16
    %s19 = sphi 0, %s17
    %s20 = sphi 0, %s18
    %s21 = sphi 0, %s19
    %s33 = sphi 0, %s35
    %s36 = sphi 0, %s33
    %s37 = sphi 0, %s36
    %s53 = sphi 0, %s37
    %s57 = sphi 0, %s57
    %s59 = sphi 0, %s57
    %s60 = sphi 0, %s59
    %s74 = sphi 0, %s60
    %s78 = sphi 0, %s78
    %s80 = sphi 0, %s78
    %s81 = sphi 0, %s80
    %s95 = sphi 0, %s81
    %s103 = sphi 0, %s105
    %s106 = sphi 0, %s103
    %s107 = sphi 0, %s106
    %s123 = sphi 0, %s107
  $region4: #{_lambda_.9} parent=0 // loop_header_branch
    %12 = sbr.rel (%p10) target = $region8
  $region5: #{_lambda_.9} parent=0 // loop_body
    %s14 = ssub.s32 %s9, 1
    %s15 = ssub.s32 %s9, 2
    %s22 = sadd.s32 1, %s17
    %p23 = scmp.ge.s32.totalorder %s22, 1
    %s24 = scalar_select %p23, 0, %s22
    %s25 = sadd.s32 1, %s16
    %s26 = scalar_select %p23, %s25, %s16
    %p27 = scmp.ge.s32.totalorder %s26, 2
    %s28 = scalar_select %p27, 0, %s26
    %s29 = ssub.s32 %s16, %s28
    %s30 = ssub.s32 %s17, %s24
    %s31 = sor.u32 %s29, %s30
    %p32 = scmp.eq.s32.totalorder %s31, 0
    %s34 = sadd.s32 %s33, 1
    %s35 = scalar_select %p32, %s33, %s34
    %p38 = pneg %p32
    %p39 = scmp.eq.s32.totalorder %s9, 1
    %p40 = por %p38, %p39
    %p41 = scmp.ne.s32.totalorder %s33, %s36
    %p42 = scmp.eq.s32.totalorder %s9, 0
    %p43 = por %p41, %p42
    %p44 = scmp.ne.s32.totalorder %s33, %s36
    %p45 = scmp.eq.s32.totalorder %s14, 1
    %p46 = por %p44, %p45
    %p47 = scmp.ne.s32.totalorder %s36, %s37
    %p48 = scmp.eq.s32.totalorder %s14, 0
    %p49 = por %p47, %p48
    %p50 = scmp.ne.s32.totalorder %s36, %s37
    %p51 = scmp.eq.s32.totalorder %s15, 1
    %p52 = por %p50, %p51
    %p54 = scmp.ne.s32.totalorder %s37, %s53
    %p55 = scmp.eq.s32.totalorder %s15, 0
    %p56 = por %p54, %p55
    %s58 = sadd.s32 %s57, 1
    %p61 = scmp.eq.s32.totalorder %s9, 1
    %p62 = scmp.ne.s32.totalorder %s57, %s59
    %p63 = scmp.eq.s32.totalorder %s9, 0
    %p64 = por %p62, %p63
    %p65 = scmp.ne.s32.totalorder %s57, %s59
    %p66 = scmp.eq.s32.totalorder %s14, 1
    %p67 = por %p65, %p66
    %p68 = scmp.ne.s32.totalorder %s59, %s60
    %p69 = scmp.eq.s32.totalorder %s14, 0
    %p70 = por %p68, %p69
    %p71 = scmp.ne.s32.totalorder %s59, %s60
    %p72 = scmp.eq.s32.totalorder %s15, 1
    %p73 = por %p71, %p72
    %p75 = scmp.ne.s32.totalorder %s60, %s74
    %p76 = scmp.eq.s32.totalorder %s15, 0
    %p77 = por %p75, %p76
    %s79 = sadd.s32 %s78, 1
    %p82 = scmp.eq.s32.totalorder %s9, 1
    %p83 = scmp.ne.s32.totalorder %s78, %s80
    %p84 = scmp.eq.s32.totalorder %s9, 0
    %p85 = por %p83, %p84
    %p86 = scmp.ne.s32.totalorder %s78, %s80
    %p87 = scmp.eq.s32.totalorder %s14, 1
    %p88 = por %p86, %p87
    %p89 = scmp.ne.s32.totalorder %s80, %s81
    %p90 = scmp.eq.s32.totalorder %s14, 0
    %p91 = por %p89, %p90
    %p92 = scmp.ne.s32.totalorder %s80, %s81
    %p93 = scmp.eq.s32.totalorder %s15, 1
    %p94 = por %p92, %p93
    %p96 = scmp.ne.s32.totalorder %s81, %s95
    %p97 = scmp.eq.s32.totalorder %s15, 0
    %p98 = por %p96, %p97
    %s99 = ssub.s32 %s16, %s28
    %s100 = ssub.s32 %s17, %s24
    %s101 = sor.u32 %s99, %s100
    %p102 = scmp.eq.s32.totalorder %s101, 0
    %s104 = sadd.s32 %s103, 1
    %s105 = scalar_select %p102, %s103, %s104
    %p108 = pneg %p102
    %p109 = scmp.eq.s32.totalorder %s9, 1
    %p110 = por %p108, %p109
    %p111 = scmp.ne.s32.totalorder %s103, %s106
    %p112 = scmp.eq.s32.totalorder %s9, 0
    %p113 = por %p111, %p112
    %p114 = scmp.ne.s32.totalorder %s103, %s106
    %p115 = scmp.eq.s32.totalorder %s14, 1
    %p116 = por %p114, %p115
    %p117 = scmp.ne.s32.totalorder %s106, %s107
    %p118 = scmp.eq.s32.totalorder %s14, 0
    %p119 = por %p117, %p118
    %p120 = scmp.ne.s32.totalorder %s106, %s107
    %p121 = scmp.eq.s32.totalorder %s15, 1
    %p122 = por %p120, %p121
    %p124 = scmp.ne.s32.totalorder %s107, %s123
    %p125 = scmp.eq.s32.totalorder %s15, 0
    %p126 = por %p124, %p125
    %p127 = scmp.le.s32.totalorder 1, %s9
    %p128 = scmp.lt.s32.totalorder %s9, 3
    %p129 = pnand %p127, %p128
    %p130 = pneg %p129
    // Predicated region
    $region9: #{_lambda_.9} parent=5 // pred_check
      _
    $region10: #{_lambda_.9} parent=5 // pred_check_branch
      %132 = sbr.rel (%p129) target = $region12
    $region11: #{_lambda_.9} parent=5 // pred_region
      %s133 = ssub.s32 %s9, 1
      // Predicated region
      $region13: #{_lambda_.9} parent=11 // pred_check
        %p134 = pneg %p70
      $region14: #{_lambda_.9} parent=11 // pred_check_branch
        %136 = sbr.rel (%p134) target = $region16
      $region15: #{_lambda_.9} parent=11 // pred_region
        _
      $region16: #{_lambda_.9} parent=11 // pred_fallthru
        _
      // Predicated region
      $region17: #{_lambda_.9} parent=11 // pred_check
        %p137 = pneg %p91
      $region18: #{_lambda_.9} parent=11 // pred_check_branch
        %139 = sbr.rel (%p137) target = $region20
      $region19: #{_lambda_.9} parent=11 // pred_region
        _
      $region20: #{_lambda_.9} parent=11 // pred_fallthru
        _
    $region12: #{_lambda_.9} parent=5 // pred_fallthru
      _
    %p140 = scmp.lt.s32.totalorder %s9, 2
    // Predicated region
    $region21: #{_lambda_.9} parent=5 // pred_check
      %p141 = pneg %p140
    $region22: #{_lambda_.9} parent=5 // pred_check_branch
      %143 = sbr.rel (%p141) target = $region24
    $region23: #{_lambda_.9} parent=5 // pred_region
      // Predicated region
      $region25: #{_lambda_.9} parent=23 // pred_check
        %p144 = pneg %p43
      $region26: #{_lambda_.9} parent=23 // pred_check_branch
        %146 = sbr.rel (%p144) target = $region28
      $region27: #{_lambda_.9} parent=23 // pred_region
        %s147 = smul.u32 2, %s17
        %p148 = scmp.lt.s32.totalorder %s16, 1
        %s149 = scalar_select %p148, %s16, 1
        %p150 = scmp.lt.s32.totalorder %s147, 1
        %s151 = scalar_select %p150, %s147, 1
        %s152 = smul.addr %s149, 2
        %s153 = sadd.s32 %s151, %s152
        %s154 = smul.addr %s153, 4
        %s155 = scalar_lea.vmem %s0, %s154
        %s156 = smul.u32 2, %s17
      $region28: #{_lambda_.9} parent=23 // pred_fallthru
        _
    $region24: #{_lambda_.9} parent=5 // pred_fallthru
      _
    %p157 = scmp.le.s32.totalorder 1, %s9
    %p158 = scmp.lt.s32.totalorder %s9, 3
    %p159 = pnand %p157, %p158
    %p160 = pneg %p159
    // Predicated region
    $region29: #{_lambda_.9} parent=5 // pred_check
      _
    $region30: #{_lambda_.9} parent=5 // pred_check_branch
      %162 = sbr.rel (%p159) target = $region32
    $region31: #{_lambda_.9} parent=5 // pred_region
      %s163 = ssub.s32 %s9, 1
      %s164 = smul.u32 2, %s19
      %p165 = scmp.lt.s32.totalorder %s18, 1
      %s166 = scalar_select %p165, %s18, 1
      %p167 = scmp.lt.s32.totalorder %s164, 1
      %s168 = scalar_select %p167, %s164, 1
      %s169 = smul.addr %s166, 2
      %s170 = sadd.s32 %s168, %s169
      %s171 = smul.addr %s170, 4
      %s172 = scalar_lea.vmem %s0, %s171
      %p173 = pneg %p49
      %p174 = pneg %p46
      %p175 = pneg %p70
      %p176 = pneg %p67
      %p177 = pneg %p91
      %p178 = pneg %p88
      %p179 = pneg %p119
      %p180 = pneg %p116
      %s181 = smul.u32 2, %s19
      %p182 = scmp.lt.s32.totalorder %s18, 1
      %s183 = scalar_select %p182, %s18, 1
      %p184 = scmp.lt.s32.totalorder %s181, 1
      %s185 = scalar_select %p184, %s181, 1
      %s186 = smul.addr %s183, 2
      %s187 = sadd.s32 %s185, %s186
      %s188 = smul.addr %s187, 4
      %s189 = scalar_lea.vmem %s3, %s188
      %s190 = smul.u32 2, %s19
      %p191 = scmp.lt.s32.totalorder %s18, 1
      %s192 = scalar_select %p191, %s18, 1
      %p193 = scmp.lt.s32.totalorder %s190, 1
      %s194 = scalar_select %p193, %s190, 1
      %s195 = smul.addr %s192, 2
      %s196 = sadd.s32 %s194, %s195
      %s197 = smul.addr %s196, 4
      %s198 = scalar_lea.vmem %s0, %s197
      %s199 = smul.u32 2, %s19
      %s200 = smul.u32 2, %s19
      %p201 = scmp.lt.s32.totalorder %s18, 1
      %s202 = scalar_select %p201, %s18, 1
      %p203 = scmp.lt.s32.totalorder %s200, 1
      %s204 = scalar_select %p203, %s200, 1
      %s205 = smul.addr %s202, 2
      %s206 = sadd.s32 %s204, %s205
      %s207 = smul.addr %s206, 4
      %s208 = scalar_lea.vmem %s3, %s207
      %s209 = smul.u32 2, %s19
      %v210 = vld [vmem:[%s198] sm:$0xff]
      %v211 = vld [vmem:[%s1] sm:$0xf]
      %213 = vset.pattern.permute.xlu0 0
      %214 = vperm.xlu0 %213, %v211
      %v215 = vpop.permute.xlu0 %214
      %v217 = vunpack.c.l.s4 839922192
      %v218 = vunpack.c.0.s8 %v217
      %v219 = vperm.slane %v215, %v218
      %v221 = vmul.f32 %v210, %v219
      %v222 = vld [vmem:[%s2] sm:$0xf]
      %224 = vset.pattern.permute.xlu0 0
      %225 = vperm.xlu0 %224, %v222
      %v226 = vpop.permute.xlu0 %225
      %v228 = vunpack.c.l.s4 839922192
      %v229 = vunpack.c.0.s8 %v228
      %v230 = vperm.slane %v226, %v229
      %v232 = vadd.f32 %v221, %v230
      %v233 = vmax.f32 %v232, 0.0
      %234 = vst [vmem:[%s208] sm:$0xff] %v233
      %s235 = smul.u32 2, %s19
      %p236 = scmp.lt.s32.totalorder %s18, 1
      %s237 = scalar_select %p236, %s18, 1
      %p238 = scmp.lt.s32.totalorder %s235, 1
      %s239 = scalar_select %p238, %s235, 1
      %s240 = smul.addr %s237, 2
      %s241 = sadd.s32 %s239, %s240
      %s242 = smul.addr %s241, 4
      %s243 = scalar_lea.vmem %s3, %s242
      // Predicated region
      $region33: #{_lambda_.9} parent=31 // pred_check
        %p244 = pneg %p116
      $region34: #{_lambda_.9} parent=31 // pred_check_branch
        %246 = sbr.rel (%p244) target = $region36
      $region35: #{_lambda_.9} parent=31 // pred_region
        %s247 = smul.u32 2, %s19
      $region36: #{_lambda_.9} parent=31 // pred_fallthru
        _
    $region32: #{_lambda_.9} parent=5 // pred_fallthru
      _
    %p248 = scmp.le.s32.totalorder 2, %s9
    // Predicated region
    $region37: #{_lambda_.9} parent=5 // pred_check
      %p249 = pneg %p248
    $region38: #{_lambda_.9} parent=5 // pred_check_branch
      %251 = sbr.rel (%p249) target = $region40
    $region39: #{_lambda_.9} parent=5 // pred_region
      %s252 = ssub.s32 %s9, 2
      // Predicated region
      $region41: #{_lambda_.9} parent=39 // pred_check
        %p253 = pneg %p122
      $region42: #{_lambda_.9} parent=39 // pred_check_branch
        %255 = sbr.rel (%p253) target = $region44
      $region43: #{_lambda_.9} parent=39 // pred_region
        %s256 = smul.u32 2, %s21
        %p257 = scmp.lt.s32.totalorder %s20, 1
        %s258 = scalar_select %p257, %s20, 1
        %p259 = scmp.lt.s32.totalorder %s256, 1
        %s260 = scalar_select %p259, %s256, 1
        %s261 = smul.addr %s258, 2
        %s262 = sadd.s32 %s260, %s261
        %s263 = smul.addr %s262, 4
        %s264 = scalar_lea.vmem %s3, %s263
      $region44: #{_lambda_.9} parent=39 // pred_fallthru
        _
    $region40: #{_lambda_.9} parent=5 // pred_fallthru
      _
  $region6: #{_lambda_.9} parent=0 // loop_footer
    %s13 = sadd.s32 1, %s9
  $region7: #{_lambda_.9} parent=0 // loop_footer_branch
    %8 = sbr.rel target = $region3
  $region8: #{_lambda_.9} parent=0 // loop_exit
    _

</llo_original>
